<compile_context>
chip_gen: v7x
topology: tpu7x:2x2x1
jax: 0.10.0
libtpu: 0.0.40
codegen_flags: <defaults>
</compile_context>

<pallas_src>
import jax
import jax.numpy as jnp
from jax.experimental import pallas as pl
from jax.experimental.pallas import tpu as pltpu

# ---- small, shape-consistent synthetic config ----
OBS_DIM = 8                                     # LunarLanderContinuous observation dim
ACTION_DIM = 2                                  # LunarLanderContinuous action dim
HORIZON = 4                                     # shrunk from 100 to keep shapes small
INPUT_DIM = (OBS_DIM + ACTION_DIM) * HORIZON    # 40
TIME_DIM = 1
HIDDEN_DIM = 128                                # module default; already lane-dense
OUT_PAD = 128                                   # lane-dense padded output width (>= INPUT_DIM)
BATCH = 256
TILE_B = 128                                    # batch rows per grid step


def _swish_f32(z):
    # Swish: sigmoid(z) * z.  exp and the approximate reciprocal both issue on the
    # EUP slot instead of a full-precision VALU divide.
    return z * pl.reciprocal(1.0 + jnp.exp(-z), approx=True)


def mlp_kernel(x_ref, t_ref,
               w0x_ref, w0t_ref, b0_ref,
               w1_ref, b1_ref,
               w2_ref, b2_ref,
               w3_ref, b3_ref,
               w4_ref, b4_ref,
               out_ref):
    """One batch tile of the fused 5-layer MLP. Weights stay resident in VMEM."""
    # Layer 0: the time channel is folded in here (replaces the wrapper concat).
    z = jnp.dot(x_ref[...], w0x_ref[...], preferred_element_type=jnp.float32)
    z = z + t_ref[...] * w0t_ref[...] + b0_ref[...]
    z = _swish_f32(z)
    # Hidden layers: bf16 matmul inputs, f32 accumulation, f32 Swish.
    for w_ref, b_ref in ((w1_ref, b1_ref), (w2_ref, b2_ref), (w3_ref, b3_ref)):
        z = jnp.dot(z.astype(jnp.bfloat16), w_ref[...],
                    preferred_element_type=jnp.float32) + b_ref[...]
        z = _swish_f32(z)
    # Output layer: 128-lane-dense write (padding columns sliced off in the wrapper).
    out_ref[...] = jnp.dot(z.astype(jnp.bfloat16), w4_ref[...],
                           preferred_element_type=jnp.float32) + b4_ref[...]


def init_params(key):
    """PyTorch nn.Linear-style init (uniform +-1/sqrt(fan_in)).

    Weights are stored pre-transposed as (in_features, out_features) in bf16.
    Layer 0 is split into an x part (INPUT_DIM, H) and a time row (1, H) so the
    kernel never needs a concatenated 41-wide input.  The last layer is
    zero-padded from INPUT_DIM to OUT_PAD output columns (lane-dense store)."""
    def linear(k, fan_in, fan_out):
        kw, kb = jax.random.split(k)
        bound = 1.0 / (fan_in ** 0.5)
        w = jax.random.uniform(kw, (fan_in, fan_out), jnp.float32, -bound, bound)
        b = jax.random.uniform(kb, (1, fan_out), jnp.float32, -bound, bound)
        return w, b

    k0, k1, k2, k3, k4 = jax.random.split(key, 5)
    w0, b0 = linear(k0, INPUT_DIM + TIME_DIM, HIDDEN_DIM)
    w1, b1 = linear(k1, HIDDEN_DIM, HIDDEN_DIM)
    w2, b2 = linear(k2, HIDDEN_DIM, HIDDEN_DIM)
    w3, b3 = linear(k3, HIDDEN_DIM, HIDDEN_DIM)
    w4, b4 = linear(k4, HIDDEN_DIM, INPUT_DIM)

    w0x = w0[:INPUT_DIM].astype(jnp.bfloat16)            # (INPUT_DIM, H)
    w0t = w0[INPUT_DIM:INPUT_DIM + 1]                    # (1, H), f32 (VPU broadcast-mul)
    w4p = jnp.zeros((HIDDEN_DIM, OUT_PAD), jnp.float32).at[:, :INPUT_DIM].set(w4)
    b4p = jnp.zeros((1, OUT_PAD), jnp.float32).at[:, :INPUT_DIM].set(b4)

    return (w0x, w0t, b0,
            w1.astype(jnp.bfloat16), b1,
            w2.astype(jnp.bfloat16), b2,
            w3.astype(jnp.bfloat16), b3,
            w4p.astype(jnp.bfloat16), b4p)


@jax.jit
def mlp_forward(x, t, params):
    """Mirrors MLP.forward: reshape, fold t into layer 0, fused kernel, reshape back."""
    sz = x.shape
    xf = x.reshape(-1, INPUT_DIM)
    B = xf.shape[0]
    tf = t.reshape(-1, TIME_DIM).astype(jnp.float32).reshape(-1, 1)
    tf = jnp.broadcast_to(tf, (B, 1))                                 # expand(B, 1)

    # Pad the batch up to a multiple of the row tile; padded rows are sliced off.
    B_pad = ((B + TILE_B - 1) // TILE_B) * TILE_B
    xp = jnp.pad(xf.astype(jnp.bfloat16), ((0, B_pad - B), (0, 0)))
    tp = jnp.pad(tf, ((0, B_pad - B), (0, 0)))

    def row_spec(width):
        return pl.BlockSpec((TILE_B, width), lambda i: (i, 0))

    def resident_spec(a):
        # Grid-invariant block index -> weight/bias DMA'd once, stays in VMEM.
        return pl.BlockSpec(a.shape, lambda i: (0, 0))

    out = pl.pallas_call(
        mlp_kernel,
        out_shape=jax.ShapeDtypeStruct((B_pad, OUT_PAD), jnp.float32),
        grid=(B_pad // TILE_B,),
        in_specs=[row_spec(INPUT_DIM), row_spec(1)] + [resident_spec(p) for p in params],
        out_specs=row_spec(OUT_PAD),
        compiler_params=pltpu.CompilerParams(dimension_semantics=("parallel",)),
    )(xp, tp, *params)

    return out[:B, :INPUT_DIM].reshape(sz)


def mlp_forward_ref(x, t, params):
    """Pure-JAX reference with the same bf16-weight / f32-accumulate math (exact sigmoid)."""
    w0x, w0t, b0, w1, b1, w2, b2, w3, b3, w4, b4 = params
    sz = x.shape
    xf = x.reshape(-1, INPUT_DIM)
    B = xf.shape[0]
    tf = jnp.broadcast_to(t.reshape(-1, TIME_DIM).astype(jnp.float32).reshape(-1, 1), (B, 1))
    swish = lambda z: jax.nn.sigmoid(z) * z
    z = jnp.dot(xf.astype(jnp.bfloat16), w0x, preferred_element_type=jnp.float32)
    z = swish(z + tf * w0t + b0)
    for w, b in ((w1, b1), (w2, b2), (w3, b3)):
        z = swish(jnp.dot(z.astype(jnp.bfloat16), w, preferred_element_type=jnp.float32) + b)
    out = jnp.dot(z.astype(jnp.bfloat16), w4, preferred_element_type=jnp.float32) + b4
    return out[:, :INPUT_DIM].reshape(sz)


if __name__ == "__main__":
    key = jax.random.PRNGKey(0)
    kp, kx, kt = jax.random.split(key, 3)

    params = init_params(kp)

    # x with a non-trivial leading shape that flattens to (BATCH, INPUT_DIM)
    x = jax.random.normal(kx, (BATCH, HORIZON, OBS_DIM + ACTION_DIM), jnp.float32)
    t = jax.random.uniform(kt, (BATCH,), jnp.float32)

    out = jax.block_until_ready(mlp_forward(x, t, params))
    ref = mlp_forward_ref(x, t, params)

    assert out.shape == x.shape
    # Tolerance covers the EUP approximate-reciprocal sigmoid and bf16 inter-layer
    # activation rounding (the reference uses the same bf16 casts, exact sigmoid).
    assert jnp.allclose(out, ref, atol=1e-2, rtol=1e-2), (
        "mismatch vs reference; max abs err = "
        + str(float(jnp.max(jnp.abs(out - ref)))))

    print("KERNEL_OK")
</pallas_src>

<mosaic_0001>
module attributes {stable_mosaic.version = 11 : i64} {
  func.func @mlp_kernel(%arg0: i32, %arg1: memref<128x40xbf16, #tpu.memory_space<vmem>>, %arg2: memref<128x1xf32, #tpu.memory_space<vmem>>, %arg3: memref<40x128xbf16, #tpu.memory_space<vmem>>, %arg4: memref<1x128xf32, #tpu.memory_space<vmem>>, %arg5: memref<1x128xf32, #tpu.memory_space<vmem>>, %arg6: memref<128x128xbf16, #tpu.memory_space<vmem>>, %arg7: memref<1x128xf32, #tpu.memory_space<vmem>>, %arg8: memref<128x128xbf16, #tpu.memory_space<vmem>>, %arg9: memref<1x128xf32, #tpu.memory_space<vmem>>, %arg10: memref<128x128xbf16, #tpu.memory_space<vmem>>, %arg11: memref<1x128xf32, #tpu.memory_space<vmem>>, %arg12: memref<128x128xbf16, #tpu.memory_space<vmem>>, %arg13: memref<1x128xf32, #tpu.memory_space<vmem>>, %arg14: memref<128x128xf32, #tpu.memory_space<vmem>>) attributes {dimension_semantics = [#tpu.dimension_semantics<parallel>], iteration_bounds = array<i64: 2>, scalar_prefetch = 0 : i64, scratch_operands = 0 : i64, tpu.core_type = #tpu.core_type<tc>, window_params = [{transform_indices = @transform_0, window_bounds = array<i64: 128, 40>}, {transform_indices = @transform_1, window_bounds = array<i64: 128, 1>}, {pipeline_mode = #tpu.pipeline_mode<synchronous>, transform_indices = @transform_2, window_bounds = array<i64: 40, 128>}, {pipeline_mode = #tpu.pipeline_mode<synchronous>, transform_indices = @transform_3, window_bounds = array<i64: 1, 128>}, {pipeline_mode = #tpu.pipeline_mode<synchronous>, transform_indices = @transform_4, window_bounds = array<i64: 1, 128>}, {pipeline_mode = #tpu.pipeline_mode<synchronous>, transform_indices = @transform_5, window_bounds = array<i64: 128, 128>}, {pipeline_mode = #tpu.pipeline_mode<synchronous>, transform_indices = @transform_6, window_bounds = array<i64: 1, 128>}, {pipeline_mode = #tpu.pipeline_mode<synchronous>, transform_indices = @transform_7, window_bounds = array<i64: 128, 128>}, {pipeline_mode = #tpu.pipeline_mode<synchronous>, transform_indices = @transform_8, window_bounds = array<i64: 1, 128>}, {pipeline_mode = #tpu.pipeline_mode<synchronous>, transform_indices = @transform_9, window_bounds = array<i64: 128, 128>}, {pipeline_mode = #tpu.pipeline_mode<synchronous>, transform_indices = @transform_10, window_bounds = array<i64: 1, 128>}, {pipeline_mode = #tpu.pipeline_mode<synchronous>, transform_indices = @transform_11, window_bounds = array<i64: 128, 128>}, {pipeline_mode = #tpu.pipeline_mode<synchronous>, transform_indices = @transform_12, window_bounds = array<i64: 1, 128>}, {transform_indices = @transform_13, window_bounds = array<i64: 128, 128>}]} {
    %c0 = arith.constant 0 : index
    %c0_0 = arith.constant 0 : index
    %0 = vector.load %arg1[%c0, %c0_0] : memref<128x40xbf16, #tpu.memory_space<vmem>>, vector<128x40xbf16>
    %c0_1 = arith.constant 0 : index
    %c0_2 = arith.constant 0 : index
    %1 = vector.load %arg3[%c0_1, %c0_2] : memref<40x128xbf16, #tpu.memory_space<vmem>>, vector<40x128xbf16>
    %cst = arith.constant dense<0.000000e+00> : vector<128x128xf32>
    %2 = tpu.matmul %0, %1, %cst {dimension_numbers = #tpu.dot_dimension_numbers<[1], [0], [0], [1], [0, 0, 1, 1], [], []>} : vector<128x40xbf16>, vector<40x128xbf16>, vector<128x128xf32> -> vector<128x128xf32>
    %c0_3 = arith.constant 0 : index
    %c0_4 = arith.constant 0 : index
    %3 = vector.load %arg2[%c0_3, %c0_4] : memref<128x1xf32, #tpu.memory_space<vmem>>, vector<128x1xf32>
    %c0_5 = arith.constant 0 : index
    %c0_6 = arith.constant 0 : index
    %4 = vector.load %arg4[%c0_5, %c0_6] : memref<1x128xf32, #tpu.memory_space<vmem>>, vector<1x128xf32>
    %5 = vector.broadcast %3 : vector<128x1xf32> to vector<128x128xf32>
    %6 = vector.broadcast %4 : vector<1x128xf32> to vector<128x128xf32>
    %7 = arith.mulf %5, %6 : vector<128x128xf32>
    %8 = arith.addf %2, %7 : vector<128x128xf32>
    %c0_7 = arith.constant 0 : index
    %c0_8 = arith.constant 0 : index
    %9 = vector.load %arg5[%c0_7, %c0_8] : memref<1x128xf32, #tpu.memory_space<vmem>>, vector<1x128xf32>
    %10 = vector.broadcast %9 : vector<1x128xf32> to vector<128x128xf32>
    %11 = arith.addf %8, %10 : vector<128x128xf32>
    %cst_9 = arith.constant 0.000000e+00 : f32
    %12 = vector.broadcast %cst_9 : f32 to vector<128x128xf32>
    %13 = arith.subf %12, %11 : vector<128x128xf32>
    %14 = math.exp %13 : vector<128x128xf32>
    %cst_10 = arith.constant 1.000000e+00 : f32
    %15 = vector.broadcast %cst_10 : f32 to vector<128x128xf32>
    %16 = arith.addf %15, %14 : vector<128x128xf32>
    %17 = tpu.reciprocal %16 {approx = true} : vector<128x128xf32> -> vector<128x128xf32>
    %18 = arith.mulf %11, %17 : vector<128x128xf32>
    %19 = arith.truncf %18 : vector<128x128xf32> to vector<128x128xbf16>
    %c0_11 = arith.constant 0 : index
    %c0_12 = arith.constant 0 : index
    %20 = vector.load %arg6[%c0_11, %c0_12] : memref<128x128xbf16, #tpu.memory_space<vmem>>, vector<128x128xbf16>
    %cst_13 = arith.constant dense<0.000000e+00> : vector<128x128xf32>
    %21 = tpu.matmul %19, %20, %cst_13 {dimension_numbers = #tpu.dot_dimension_numbers<[1], [0], [0], [1], [0, 0, 1, 1], [], []>} : vector<128x128xbf16>, vector<128x128xbf16>, vector<128x128xf32> -> vector<128x128xf32>
    %c0_14 = arith.constant 0 : index
    %c0_15 = arith.constant 0 : index
    %22 = vector.load %arg7[%c0_14, %c0_15] : memref<1x128xf32, #tpu.memory_space<vmem>>, vector<1x128xf32>
    %23 = vector.broadcast %22 : vector<1x128xf32> to vector<128x128xf32>
    %24 = arith.addf %21, %23 : vector<128x128xf32>
    %cst_16 = arith.constant 0.000000e+00 : f32
    %25 = vector.broadcast %cst_16 : f32 to vector<128x128xf32>
    %26 = arith.subf %25, %24 : vector<128x128xf32>
    %27 = math.exp %26 : vector<128x128xf32>
    %cst_17 = arith.constant 1.000000e+00 : f32
    %28 = vector.broadcast %cst_17 : f32 to vector<128x128xf32>
    %29 = arith.addf %28, %27 : vector<128x128xf32>
    %30 = tpu.reciprocal %29 {approx = true} : vector<128x128xf32> -> vector<128x128xf32>
    %31 = arith.mulf %24, %30 : vector<128x128xf32>
    %32 = arith.truncf %31 : vector<128x128xf32> to vector<128x128xbf16>
    %c0_18 = arith.constant 0 : index
    %c0_19 = arith.constant 0 : index
    %33 = vector.load %arg8[%c0_18, %c0_19] : memref<128x128xbf16, #tpu.memory_space<vmem>>, vector<128x128xbf16>
    %cst_20 = arith.constant dense<0.000000e+00> : vector<128x128xf32>
    %34 = tpu.matmul %32, %33, %cst_20 {dimension_numbers = #tpu.dot_dimension_numbers<[1], [0], [0], [1], [0, 0, 1, 1], [], []>} : vector<128x128xbf16>, vector<128x128xbf16>, vector<128x128xf32> -> vector<128x128xf32>
    %c0_21 = arith.constant 0 : index
    %c0_22 = arith.constant 0 : index
    %35 = vector.load %arg9[%c0_21, %c0_22] : memref<1x128xf32, #tpu.memory_space<vmem>>, vector<1x128xf32>
    %36 = vector.broadcast %35 : vector<1x128xf32> to vector<128x128xf32>
    %37 = arith.addf %34, %36 : vector<128x128xf32>
    %cst_23 = arith.constant 0.000000e+00 : f32
    %38 = vector.broadcast %cst_23 : f32 to vector<128x128xf32>
    %39 = arith.subf %38, %37 : vector<128x128xf32>
    %40 = math.exp %39 : vector<128x128xf32>
    %cst_24 = arith.constant 1.000000e+00 : f32
    %41 = vector.broadcast %cst_24 : f32 to vector<128x128xf32>
    %42 = arith.addf %41, %40 : vector<128x128xf32>
    %43 = tpu.reciprocal %42 {approx = true} : vector<128x128xf32> -> vector<128x128xf32>
    %44 = arith.mulf %37, %43 : vector<128x128xf32>
    %45 = arith.truncf %44 : vector<128x128xf32> to vector<128x128xbf16>
    %c0_25 = arith.constant 0 : index
    %c0_26 = arith.constant 0 : index
    %46 = vector.load %arg10[%c0_25, %c0_26] : memref<128x128xbf16, #tpu.memory_space<vmem>>, vector<128x128xbf16>
    %cst_27 = arith.constant dense<0.000000e+00> : vector<128x128xf32>
    %47 = tpu.matmul %45, %46, %cst_27 {dimension_numbers = #tpu.dot_dimension_numbers<[1], [0], [0], [1], [0, 0, 1, 1], [], []>} : vector<128x128xbf16>, vector<128x128xbf16>, vector<128x128xf32> -> vector<128x128xf32>
    %c0_28 = arith.constant 0 : index
    %c0_29 = arith.constant 0 : index
    %48 = vector.load %arg11[%c0_28, %c0_29] : memref<1x128xf32, #tpu.memory_space<vmem>>, vector<1x128xf32>
    %49 = vector.broadcast %48 : vector<1x128xf32> to vector<128x128xf32>
    %50 = arith.addf %47, %49 : vector<128x128xf32>
    %cst_30 = arith.constant 0.000000e+00 : f32
    %51 = vector.broadcast %cst_30 : f32 to vector<128x128xf32>
    %52 = arith.subf %51, %50 : vector<128x128xf32>
    %53 = math.exp %52 : vector<128x128xf32>
    %cst_31 = arith.constant 1.000000e+00 : f32
    %54 = vector.broadcast %cst_31 : f32 to vector<128x128xf32>
    %55 = arith.addf %54, %53 : vector<128x128xf32>
    %56 = tpu.reciprocal %55 {approx = true} : vector<128x128xf32> -> vector<128x128xf32>
    %57 = arith.mulf %50, %56 : vector<128x128xf32>
    %58 = arith.truncf %57 : vector<128x128xf32> to vector<128x128xbf16>
    %c0_32 = arith.constant 0 : index
    %c0_33 = arith.constant 0 : index
    %59 = vector.load %arg12[%c0_32, %c0_33] : memref<128x128xbf16, #tpu.memory_space<vmem>>, vector<128x128xbf16>
    %cst_34 = arith.constant dense<0.000000e+00> : vector<128x128xf32>
    %60 = tpu.matmul %58, %59, %cst_34 {dimension_numbers = #tpu.dot_dimension_numbers<[1], [0], [0], [1], [0, 0, 1, 1], [], []>} : vector<128x128xbf16>, vector<128x128xbf16>, vector<128x128xf32> -> vector<128x128xf32>
    %c0_35 = arith.constant 0 : index
    %c0_36 = arith.constant 0 : index
    %61 = vector.load %arg13[%c0_35, %c0_36] : memref<1x128xf32, #tpu.memory_space<vmem>>, vector<1x128xf32>
    %62 = vector.broadcast %61 : vector<1x128xf32> to vector<128x128xf32>
    %63 = arith.addf %60, %62 : vector<128x128xf32>
    %c0_37 = arith.constant 0 : index
    %c0_38 = arith.constant 0 : index
    %64 = vector.load %arg14[%c0_37, %c0_38] : memref<128x128xf32, #tpu.memory_space<vmem>>, vector<128x128xf32>
    tpu.vector_store %arg14[%c0_37, %c0_38], %63 {strides = array<i32>} : memref<128x128xf32, #tpu.memory_space<vmem>>, vector<128x128xf32>,
    return
  }
  func.func @transform_0(%arg0: i32) -> (i32, i32) {
    %c0_i32 = arith.constant 0 : i32
    %c0_i32_0 = arith.constant 0 : i32
    return %arg0, %c0_i32 : i32, i32
  }
  func.func @transform_1(%arg0: i32) -> (i32, i32) {
    %c0_i32 = arith.constant 0 : i32
    %c0_i32_0 = arith.constant 0 : i32
    return %arg0, %c0_i32 : i32, i32
  }
  func.func @transform_2(%arg0: i32) -> (i32, i32) {
    %c0_i32 = arith.constant 0 : i32
    %c0_i32_0 = arith.constant 0 : i32
    %c0_i32_1 = arith.constant 0 : i32
    return %c0_i32, %c0_i32_0 : i32, i32
  }
  func.func @transform_3(%arg0: i32) -> (i32, i32) {
    %c0_i32 = arith.constant 0 : i32
    %c0_i32_0 = arith.constant 0 : i32
    %c0_i32_1 = arith.constant 0 : i32
    return %c0_i32, %c0_i32_0 : i32, i32
  }
  func.func @transform_4(%arg0: i32) -> (i32, i32) {
    %c0_i32 = arith.constant 0 : i32
    %c0_i32_0 = arith.constant 0 : i32
    %c0_i32_1 = arith.constant 0 : i32
    return %c0_i32, %c0_i32_0 : i32, i32
  }
  func.func @transform_5(%arg0: i32) -> (i32, i32) {
    %c0_i32 = arith.constant 0 : i32
    %c0_i32_0 = arith.constant 0 : i32
    %c0_i32_1 = arith.constant 0 : i32
    return %c0_i32, %c0_i32_0 : i32, i32
  }
  func.func @transform_6(%arg0: i32) -> (i32, i32) {
    %c0_i32 = arith.constant 0 : i32
    %c0_i32_0 = arith.constant 0 : i32
    %c0_i32_1 = arith.constant 0 : i32
    return %c0_i32, %c0_i32_0 : i32, i32
  }
  func.func @transform_7(%arg0: i32) -> (i32, i32) {
    %c0_i32 = arith.constant 0 : i32
    %c0_i32_0 = arith.constant 0 : i32
    %c0_i32_1 = arith.constant 0 : i32
    return %c0_i32, %c0_i32_0 : i32, i32
  }
  func.func @transform_8(%arg0: i32) -> (i32, i32) {
    %c0_i32 = arith.constant 0 : i32
    %c0_i32_0 = arith.constant 0 : i32
    %c0_i32_1 = arith.constant 0 : i32
    return %c0_i32, %c0_i32_0 : i32, i32
  }
  func.func @transform_9(%arg0: i32) -> (i32, i32) {
    %c0_i32 = arith.constant 0 : i32
    %c0_i32_0 = arith.constant 0 : i32
    %c0_i32_1 = arith.constant 0 : i32
    return %c0_i32, %c0_i32_0 : i32, i32
  }
  func.func @transform_10(%arg0: i32) -> (i32, i32) {
    %c0_i32 = arith.constant 0 : i32
    %c0_i32_0 = arith.constant 0 : i32
    %c0_i32_1 = arith.constant 0 : i32
    return %c0_i32, %c0_i32_0 : i32, i32
  }
  func.func @transform_11(%arg0: i32) -> (i32, i32) {
    %c0_i32 = arith.constant 0 : i32
    %c0_i32_0 = arith.constant 0 : i32
    %c0_i32_1 = arith.constant 0 : i32
    return %c0_i32, %c0_i32_0 : i32, i32
  }
  func.func @transform_12(%arg0: i32) -> (i32, i32) {
    %c0_i32 = arith.constant 0 : i32
    %c0_i32_0 = arith.constant 0 : i32
    %c0_i32_1 = arith.constant 0 : i32
    return %c0_i32, %c0_i32_0 : i32, i32
  }
  func.func @transform_13(%arg0: i32) -> (i32, i32) {
    %c0_i32 = arith.constant 0 : i32
    %c0_i32_0 = arith.constant 0 : i32
    return %arg0, %c0_i32 : i32, i32
  }
}

</mosaic_0001>

<llo_original>
// kernel: mlp_forward.1
$region0: #{mlp_forward.1}
  #allocation0 [shape = 'u32[]', space=smem, size = 0x4, offset = 0x4, fixed_abs, tag = 'smem constant byte address 0x4 - core index']
  #allocation1 [shape = 'u32[144,128]{1,0:T(1,128)}', space=vmem, size = 0x12000, scoped, tag = 'internal scratch']
  %s0 = inlined_call_operand.vmem [shape: bf16[256,40], index: 0, kind: input, shape index: {}]
  %s1 = inlined_call_operand.vmem [shape: f32[256,1], index: 1, kind: input, shape index: {}]
  %s2 = inlined_call_operand.vmem [shape: bf16[40,128], index: 2, kind: input, shape index: {}]
  %s3 = inlined_call_operand.vmem [shape: f32[1,128], index: 3, kind: input, shape index: {}]
  %s4 = inlined_call_operand.vmem [shape: f32[1,128], index: 4, kind: input, shape index: {}]
  %s5 = inlined_call_operand.vmem [shape: bf16[128,128], index: 5, kind: input, shape index: {}]
  %s6 = inlined_call_operand.vmem [shape: f32[1,128], index: 6, kind: input, shape index: {}]
  %s7 = inlined_call_operand.vmem [shape: bf16[128,128], index: 7, kind: input, shape index: {}]
  %s8 = inlined_call_operand.vmem [shape: f32[1,128], index: 8, kind: input, shape index: {}]
  %s9 = inlined_call_operand.vmem [shape: bf16[128,128], index: 9, kind: input, shape index: {}]
  %s10 = inlined_call_operand.vmem [shape: f32[1,128], index: 10, kind: input, shape index: {}]
  %s11 = inlined_call_operand.vmem [shape: bf16[128,128], index: 11, kind: input, shape index: {}]
  %s12 = inlined_call_operand.vmem [shape: f32[1,128], index: 12, kind: input, shape index: {}]
  %s13 = inlined_call_operand.vmem [shape: f32[256,128], index: 13, kind: output, shape index: {}]
  %s14 = sld [smem:[#allocation0]]
  $region85: #{mlp_forward.1} parent=0
    _
  %s16 = ssub.s32 1, %s14
  %s17 = scalar_select 0, %s16, %s14
  loop: start=0, step=1, limit=4
  $region2: #{mlp_forward.1} parent=0 // loop_pre_header
    _
  $region3: #{mlp_forward.1} parent=0 // loop_header
    %s19 = sphi 0, %s23
    %p20 = scmp.ge.s32.totalorder %s19, 4
    %s29 = sphi 0, %s31
    %s32 = sphi 0, %s29
    %s33 = sphi 0, %s32
    %s49 = sphi 0, %s33
    %s55 = sphi 0, %s57
    %s58 = sphi 0, %s55
    %s59 = sphi 0, %s58
    %s75 = sphi 0, %s59
    %s79 = sphi 0, %s79
    %s81 = sphi 0, %s79
    %s82 = sphi 0, %s81
    %s96 = sphi 0, %s82
    %s100 = sphi 0, %s100
    %s102 = sphi 0, %s100
    %s103 = sphi 0, %s102
    %s117 = sphi 0, %s103
    %s121 = sphi 0, %s121
    %s123 = sphi 0, %s121
    %s124 = sphi 0, %s123
    %s138 = sphi 0, %s124
    %s142 = sphi 0, %s142
    %s144 = sphi 0, %s142
    %s145 = sphi 0, %s144
    %s159 = sphi 0, %s145
    %s163 = sphi 0, %s163
    %s165 = sphi 0, %s163
    %s166 = sphi 0, %s165
    %s180 = sphi 0, %s166
    %s184 = sphi 0, %s184
    %s186 = sphi 0, %s184
    %s187 = sphi 0, %s186
    %s201 = sphi 0, %s187
    %s205 = sphi 0, %s205
    %s207 = sphi 0, %s205
    %s208 = sphi 0, %s207
    %s222 = sphi 0, %s208
    %s226 = sphi 0, %s226
    %s228 = sphi 0, %s226
    %s229 = sphi 0, %s228
    %s243 = sphi 0, %s229
    %s247 = sphi 0, %s247
    %s249 = sphi 0, %s247
    %s250 = sphi 0, %s249
    %s264 = sphi 0, %s250
    %s268 = sphi 0, %s268
    %s270 = sphi 0, %s268
    %s271 = sphi 0, %s270
    %s285 = sphi 0, %s271
    %s289 = sphi 0, %s289
    %s291 = sphi 0, %s289
    %s292 = sphi 0, %s291
    %s306 = sphi 0, %s292
    %s312 = sphi 0, %s314
    %s315 = sphi 0, %s312
    %s316 = sphi 0, %s315
    %s332 = sphi 0, %s316
  $region4: #{mlp_forward.1} parent=0 // loop_header_branch
    %22 = sbr.rel (%p20) target = $region8
  $region5: #{mlp_forward.1} parent=0 // loop_body
    %s24 = ssub.s32 %s19, 1
    %s25 = ssub.s32 %s19, 2
    %s26 = sadd.s32 %s19, 1
    %s27 = ssub.s32 %s19, %s26
    %p28 = scmp.eq.s32.totalorder %s27, 0
    %s30 = sadd.s32 %s29, 1
    %s31 = scalar_select %p28, %s29, %s30
    %p34 = pneg %p28
    %p35 = scmp.eq.s32.totalorder %s19, 1
    %p36 = por %p34, %p35
    %p37 = scmp.ne.s32.totalorder %s29, %s32
    %p38 = scmp.eq.s32.totalorder %s19, 0
    %p39 = por %p37, %p38
    %p40 = scmp.ne.s32.totalorder %s29, %s32
    %p41 = scmp.eq.s32.totalorder %s24, 1
    %p42 = por %p40, %p41
    %p43 = scmp.ne.s32.totalorder %s32, %s33
    %p44 = scmp.eq.s32.totalorder %s24, 0
    %p45 = por %p43, %p44
    %p46 = scmp.ne.s32.totalorder %s32, %s33
    %p47 = scmp.eq.s32.totalorder %s25, 1
    %p48 = por %p46, %p47
    %p50 = scmp.ne.s32.totalorder %s33, %s49
    %p51 = scmp.eq.s32.totalorder %s25, 0
    %p52 = por %p50, %p51
    %s53 = ssub.s32 %s19, %s26
    %p54 = scmp.eq.s32.totalorder %s53, 0
    %s56 = sadd.s32 %s55, 1
    %s57 = scalar_select %p54, %s55, %s56
    %p60 = pneg %p54
    %p61 = scmp.eq.s32.totalorder %s19, 1
    %p62 = por %p60, %p61
    %p63 = scmp.ne.s32.totalorder %s55, %s58
    %p64 = scmp.eq.s32.totalorder %s19, 0
    %p65 = por %p63, %p64
    %p66 = scmp.ne.s32.totalorder %s55, %s58
    %p67 = scmp.eq.s32.totalorder %s24, 1
    %p68 = por %p66, %p67
    %p69 = scmp.ne.s32.totalorder %s58, %s59
    %p70 = scmp.eq.s32.totalorder %s24, 0
    %p71 = por %p69, %p70
    %p72 = scmp.ne.s32.totalorder %s58, %s59
    %p73 = scmp.eq.s32.totalorder %s25, 1
    %p74 = por %p72, %p73
    %p76 = scmp.ne.s32.totalorder %s59, %s75
    %p77 = scmp.eq.s32.totalorder %s25, 0
    %p78 = por %p76, %p77
    %s80 = sadd.s32 %s79, 1
    %p83 = scmp.eq.s32.totalorder %s19, 1
    %p84 = scmp.ne.s32.totalorder %s79, %s81
    %p85 = scmp.eq.s32.totalorder %s19, 0
    %p86 = por %p84, %p85
    %p87 = scmp.ne.s32.totalorder %s79, %s81
    %p88 = scmp.eq.s32.totalorder %s24, 1
    %p89 = por %p87, %p88
    %p90 = scmp.ne.s32.totalorder %s81, %s82
    %p91 = scmp.eq.s32.totalorder %s24, 0
    %p92 = por %p90, %p91
    %p93 = scmp.ne.s32.totalorder %s81, %s82
    %p94 = scmp.eq.s32.totalorder %s25, 1
    %p95 = por %p93, %p94
    %p97 = scmp.ne.s32.totalorder %s82, %s96
    %p98 = scmp.eq.s32.totalorder %s25, 0
    %p99 = por %p97, %p98
    %s101 = sadd.s32 %s100, 1
    %p104 = scmp.eq.s32.totalorder %s19, 1
    %p105 = scmp.ne.s32.totalorder %s100, %s102
    %p106 = scmp.eq.s32.totalorder %s19, 0
    %p107 = por %p105, %p106
    %p108 = scmp.ne.s32.totalorder %s100, %s102
    %p109 = scmp.eq.s32.totalorder %s24, 1
    %p110 = por %p108, %p109
    %p111 = scmp.ne.s32.totalorder %s102, %s103
    %p112 = scmp.eq.s32.totalorder %s24, 0
    %p113 = por %p111, %p112
    %p114 = scmp.ne.s32.totalorder %s102, %s103
    %p115 = scmp.eq.s32.totalorder %s25, 1
    %p116 = por %p114, %p115
    %p118 = scmp.ne.s32.totalorder %s103, %s117
    %p119 = scmp.eq.s32.totalorder %s25, 0
    %p120 = por %p118, %p119
    %s122 = sadd.s32 %s121, 1
    %p125 = scmp.eq.s32.totalorder %s19, 1
    %p126 = scmp.ne.s32.totalorder %s121, %s123
    %p127 = scmp.eq.s32.totalorder %s19, 0
    %p128 = por %p126, %p127
    %p129 = scmp.ne.s32.totalorder %s121, %s123
    %p130 = scmp.eq.s32.totalorder %s24, 1
    %p131 = por %p129, %p130
    %p132 = scmp.ne.s32.totalorder %s123, %s124
    %p133 = scmp.eq.s32.totalorder %s24, 0
    %p134 = por %p132, %p133
    %p135 = scmp.ne.s32.totalorder %s123, %s124
    %p136 = scmp.eq.s32.totalorder %s25, 1
    %p137 = por %p135, %p136
    %p139 = scmp.ne.s32.totalorder %s124, %s138
    %p140 = scmp.eq.s32.totalorder %s25, 0
    %p141 = por %p139, %p140
    %s143 = sadd.s32 %s142, 1
    %p146 = scmp.eq.s32.totalorder %s19, 1
    %p147 = scmp.ne.s32.totalorder %s142, %s144
    %p148 = scmp.eq.s32.totalorder %s19, 0
    %p149 = por %p147, %p148
    %p150 = scmp.ne.s32.totalorder %s142, %s144
    %p151 = scmp.eq.s32.totalorder %s24, 1
    %p152 = por %p150, %p151
    %p153 = scmp.ne.s32.totalorder %s144, %s145
    %p154 = scmp.eq.s32.totalorder %s24, 0
    %p155 = por %p153, %p154
    %p156 = scmp.ne.s32.totalorder %s144, %s145
    %p157 = scmp.eq.s32.totalorder %s25, 1
    %p158 = por %p156, %p157
    %p160 = scmp.ne.s32.totalorder %s145, %s159
    %p161 = scmp.eq.s32.totalorder %s25, 0
    %p162 = por %p160, %p161
    %s164 = sadd.s32 %s163, 1
    %p167 = scmp.eq.s32.totalorder %s19, 1
    %p168 = scmp.ne.s32.totalorder %s163, %s165
    %p169 = scmp.eq.s32.totalorder %s19, 0
    %p170 = por %p168, %p169
    %p171 = scmp.ne.s32.totalorder %s163, %s165
    %p172 = scmp.eq.s32.totalorder %s24, 1
    %p173 = por %p171, %p172
    %p174 = scmp.ne.s32.totalorder %s165, %s166
    %p175 = scmp.eq.s32.totalorder %s24, 0
    %p176 = por %p174, %p175
    %p177 = scmp.ne.s32.totalorder %s165, %s166
    %p178 = scmp.eq.s32.totalorder %s25, 1
    %p179 = por %p177, %p178
    %p181 = scmp.ne.s32.totalorder %s166, %s180
    %p182 = scmp.eq.s32.totalorder %s25, 0
    %p183 = por %p181, %p182
    %s185 = sadd.s32 %s184, 1
    %p188 = scmp.eq.s32.totalorder %s19, 1
    %p189 = scmp.ne.s32.totalorder %s184, %s186
    %p190 = scmp.eq.s32.totalorder %s19, 0
    %p191 = por %p189, %p190
    %p192 = scmp.ne.s32.totalorder %s184, %s186
    %p193 = scmp.eq.s32.totalorder %s24, 1
    %p194 = por %p192, %p193
    %p195 = scmp.ne.s32.totalorder %s186, %s187
    %p196 = scmp.eq.s32.totalorder %s24, 0
    %p197 = por %p195, %p196
    %p198 = scmp.ne.s32.totalorder %s186, %s187
    %p199 = scmp.eq.s32.totalorder %s25, 1
    %p200 = por %p198, %p199
    %p202 = scmp.ne.s32.totalorder %s187, %s201
    %p203 = scmp.eq.s32.totalorder %s25, 0
    %p204 = por %p202, %p203
    %s206 = sadd.s32 %s205, 1
    %p209 = scmp.eq.s32.totalorder %s19, 1
    %p210 = scmp.ne.s32.totalorder %s205, %s207
    %p211 = scmp.eq.s32.totalorder %s19, 0
    %p212 = por %p210, %p211
    %p213 = scmp.ne.s32.totalorder %s205, %s207
    %p214 = scmp.eq.s32.totalorder %s24, 1
    %p215 = por %p213, %p214
    %p216 = scmp.ne.s32.totalorder %s207, %s208
    %p217 = scmp.eq.s32.totalorder %s24, 0
    %p218 = por %p216, %p217
    %p219 = scmp.ne.s32.totalorder %s207, %s208
    %p220 = scmp.eq.s32.totalorder %s25, 1
    %p221 = por %p219, %p220
    %p223 = scmp.ne.s32.totalorder %s208, %s222
    %p224 = scmp.eq.s32.totalorder %s25, 0
    %p225 = por %p223, %p224
    %s227 = sadd.s32 %s226, 1
    %p230 = scmp.eq.s32.totalorder %s19, 1
    %p231 = scmp.ne.s32.totalorder %s226, %s228
    %p232 = scmp.eq.s32.totalorder %s19, 0
    %p233 = por %p231, %p232
    %p234 = scmp.ne.s32.totalorder %s226, %s228
    %p235 = scmp.eq.s32.totalorder %s24, 1
    %p236 = por %p234, %p235
    %p237 = scmp.ne.s32.totalorder %s228, %s229
    %p238 = scmp.eq.s32.totalorder %s24, 0
    %p239 = por %p237, %p238
    %p240 = scmp.ne.s32.totalorder %s228, %s229
    %p241 = scmp.eq.s32.totalorder %s25, 1
    %p242 = por %p240, %p241
    %p244 = scmp.ne.s32.totalorder %s229, %s243
    %p245 = scmp.eq.s32.totalorder %s25, 0
    %p246 = por %p244, %p245
    %s248 = sadd.s32 %s247, 1
    %p251 = scmp.eq.s32.totalorder %s19, 1
    %p252 = scmp.ne.s32.totalorder %s247, %s249
    %p253 = scmp.eq.s32.totalorder %s19, 0
    %p254 = por %p252, %p253
    %p255 = scmp.ne.s32.totalorder %s247, %s249
    %p256 = scmp.eq.s32.totalorder %s24, 1
    %p257 = por %p255, %p256
    %p258 = scmp.ne.s32.totalorder %s249, %s250
    %p259 = scmp.eq.s32.totalorder %s24, 0
    %p260 = por %p258, %p259
    %p261 = scmp.ne.s32.totalorder %s249, %s250
    %p262 = scmp.eq.s32.totalorder %s25, 1
    %p263 = por %p261, %p262
    %p265 = scmp.ne.s32.totalorder %s250, %s264
    %p266 = scmp.eq.s32.totalorder %s25, 0
    %p267 = por %p265, %p266
    %s269 = sadd.s32 %s268, 1
    %p272 = scmp.eq.s32.totalorder %s19, 1
    %p273 = scmp.ne.s32.totalorder %s268, %s270
    %p274 = scmp.eq.s32.totalorder %s19, 0
    %p275 = por %p273, %p274
    %p276 = scmp.ne.s32.totalorder %s268, %s270
    %p277 = scmp.eq.s32.totalorder %s24, 1
    %p278 = por %p276, %p277
    %p279 = scmp.ne.s32.totalorder %s270, %s271
    %p280 = scmp.eq.s32.totalorder %s24, 0
    %p281 = por %p279, %p280
    %p282 = scmp.ne.s32.totalorder %s270, %s271
    %p283 = scmp.eq.s32.totalorder %s25, 1
    %p284 = por %p282, %p283
    %p286 = scmp.ne.s32.totalorder %s271, %s285
    %p287 = scmp.eq.s32.totalorder %s25, 0
    %p288 = por %p286, %p287
    %s290 = sadd.s32 %s289, 1
    %p293 = scmp.eq.s32.totalorder %s19, 1
    %p294 = scmp.ne.s32.totalorder %s289, %s291
    %p295 = scmp.eq.s32.totalorder %s19, 0
    %p296 = por %p294, %p295
    %p297 = scmp.ne.s32.totalorder %s289, %s291
    %p298 = scmp.eq.s32.totalorder %s24, 1
    %p299 = por %p297, %p298
    %p300 = scmp.ne.s32.totalorder %s291, %s292
    %p301 = scmp.eq.s32.totalorder %s24, 0
    %p302 = por %p300, %p301
    %p303 = scmp.ne.s32.totalorder %s291, %s292
    %p304 = scmp.eq.s32.totalorder %s25, 1
    %p305 = por %p303, %p304
    %p307 = scmp.ne.s32.totalorder %s292, %s306
    %p308 = scmp.eq.s32.totalorder %s25, 0
    %p309 = por %p307, %p308
    %s310 = ssub.s32 %s19, %s26
    %p311 = scmp.eq.s32.totalorder %s310, 0
    %s313 = sadd.s32 %s312, 1
    %s314 = scalar_select %p311, %s312, %s313
    %p317 = pneg %p311
    %p318 = scmp.eq.s32.totalorder %s19, 1
    %p319 = por %p317, %p318
    %p320 = scmp.ne.s32.totalorder %s312, %s315
    %p321 = scmp.eq.s32.totalorder %s19, 0
    %p322 = por %p320, %p321
    %p323 = scmp.ne.s32.totalorder %s312, %s315
    %p324 = scmp.eq.s32.totalorder %s24, 1
    %p325 = por %p323, %p324
    %p326 = scmp.ne.s32.totalorder %s315, %s316
    %p327 = scmp.eq.s32.totalorder %s24, 0
    %p328 = por %p326, %p327
    %p329 = scmp.ne.s32.totalorder %s315, %s316
    %p330 = scmp.eq.s32.totalorder %s25, 1
    %p331 = por %p329, %p330
    %p333 = scmp.ne.s32.totalorder %s316, %s332
    %p334 = scmp.eq.s32.totalorder %s25, 0
    %p335 = por %p333, %p334
    %p336 = scmp.le.s32.totalorder 1, %s19
    %p337 = scmp.lt.s32.totalorder %s19, 3
    %p338 = pnand %p336, %p337
    %p339 = pneg %p338
    // Predicated region
    $region9: #{mlp_forward.1} parent=5 // pred_check
      _
    $region10: #{mlp_forward.1} parent=5 // pred_check_branch
      %341 = sbr.rel (%p338) target = $region12
    $region11: #{mlp_forward.1} parent=5 // pred_region
      %s342 = ssub.s32 %s19, 1
      // Predicated region
      $region13: #{mlp_forward.1} parent=11 // pred_check
        %p343 = pneg %p92
      $region14: #{mlp_forward.1} parent=11 // pred_check_branch
        %345 = sbr.rel (%p343) target = $region16
      $region15: #{mlp_forward.1} parent=11 // pred_region
        _
      $region16: #{mlp_forward.1} parent=11 // pred_fallthru
        _
      // Predicated region
      $region17: #{mlp_forward.1} parent=11 // pred_check
        %p346 = pneg %p113
      $region18: #{mlp_forward.1} parent=11 // pred_check_branch
        %348 = sbr.rel (%p346) target = $region20
      $region19: #{mlp_forward.1} parent=11 // pred_region
        _
      $region20: #{mlp_forward.1} parent=11 // pred_fallthru
        _
      // Predicated region
      $region21: #{mlp_forward.1} parent=11 // pred_check
        %p349 = pneg %p134
      $region22: #{mlp_forward.1} parent=11 // pred_check_branch
        %351 = sbr.rel (%p349) target = $region24
      $region23: #{mlp_forward.1} parent=11 // pred_region
        _
      $region24: #{mlp_forward.1} parent=11 // pred_fallthru
        _
      // Predicated region
      $region25: #{mlp_forward.1} parent=11 // pred_check
        %p352 = pneg %p155
      $region26: #{mlp_forward.1} parent=11 // pred_check_branch
        %354 = sbr.rel (%p352) target = $region28
      $region27: #{mlp_forward.1} parent=11 // pred_region
        _
      $region28: #{mlp_forward.1} parent=11 // pred_fallthru
        _
      // Predicated region
      $region29: #{mlp_forward.1} parent=11 // pred_check
        %p355 = pneg %p176
      $region30: #{mlp_forward.1} parent=11 // pred_check_branch
        %357 = sbr.rel (%p355) target = $region32
      $region31: #{mlp_forward.1} parent=11 // pred_region
        _
      $region32: #{mlp_forward.1} parent=11 // pred_fallthru
        _
      // Predicated region
      $region33: #{mlp_forward.1} parent=11 // pred_check
        %p358 = pneg %p197
      $region34: #{mlp_forward.1} parent=11 // pred_check_branch
        %360 = sbr.rel (%p358) target = $region36
      $region35: #{mlp_forward.1} parent=11 // pred_region
        _
      $region36: #{mlp_forward.1} parent=11 // pred_fallthru
        _
      // Predicated region
      $region37: #{mlp_forward.1} parent=11 // pred_check
        %p361 = pneg %p218
      $region38: #{mlp_forward.1} parent=11 // pred_check_branch
        %363 = sbr.rel (%p361) target = $region40
      $region39: #{mlp_forward.1} parent=11 // pred_region
        _
      $region40: #{mlp_forward.1} parent=11 // pred_fallthru
        _
      // Predicated region
      $region41: #{mlp_forward.1} parent=11 // pred_check
        %p364 = pneg %p239
      $region42: #{mlp_forward.1} parent=11 // pred_check_branch
        %366 = sbr.rel (%p364) target = $region44
      $region43: #{mlp_forward.1} parent=11 // pred_region
        _
      $region44: #{mlp_forward.1} parent=11 // pred_fallthru
        _
      // Predicated region
      $region45: #{mlp_forward.1} parent=11 // pred_check
        %p367 = pneg %p260
      $region46: #{mlp_forward.1} parent=11 // pred_check_branch
        %369 = sbr.rel (%p367) target = $region48
      $region47: #{mlp_forward.1} parent=11 // pred_region
        _
      $region48: #{mlp_forward.1} parent=11 // pred_fallthru
        _
      // Predicated region
      $region49: #{mlp_forward.1} parent=11 // pred_check
        %p370 = pneg %p281
      $region50: #{mlp_forward.1} parent=11 // pred_check_branch
        %372 = sbr.rel (%p370) target = $region52
      $region51: #{mlp_forward.1} parent=11 // pred_region
        _
      $region52: #{mlp_forward.1} parent=11 // pred_fallthru
        _
      // Predicated region
      $region53: #{mlp_forward.1} parent=11 // pred_check
        %p373 = pneg %p302
      $region54: #{mlp_forward.1} parent=11 // pred_check_branch
        %375 = sbr.rel (%p373) target = $region56
      $region55: #{mlp_forward.1} parent=11 // pred_region
        _
      $region56: #{mlp_forward.1} parent=11 // pred_fallthru
        _
    $region12: #{mlp_forward.1} parent=5 // pred_fallthru
      _
    %p376 = scmp.lt.s32.totalorder %s19, 2
    // Predicated region
    $region57: #{mlp_forward.1} parent=5 // pred_check
      %p377 = pneg %p376
    $region58: #{mlp_forward.1} parent=5 // pred_check_branch
      %379 = sbr.rel (%p377) target = $region60
    $region59: #{mlp_forward.1} parent=5 // pred_region
      // Predicated region
      $region61: #{mlp_forward.1} parent=59 // pred_check
        %p380 = pneg %p39
      $region62: #{mlp_forward.1} parent=59 // pred_check_branch
        %382 = sbr.rel (%p380) target = $region64
      $region63: #{mlp_forward.1} parent=59 // pred_region
        %s383 = smul.u32 16, %s19
        %p384 = scmp.lt.s32.totalorder %s383, 31
        %s385 = scalar_select %p384, %s383, 31
        %s386 = smul.addr %s385, 4
        %s387 = scalar_lea.vmem %s0, %s386
        %s388 = smul.u32 16, %s19
      $region64: #{mlp_forward.1} parent=59 // pred_fallthru
        _
      // Predicated region
      $region65: #{mlp_forward.1} parent=59 // pred_check
        %p389 = pneg %p65
      $region66: #{mlp_forward.1} parent=59 // pred_check_branch
        %391 = sbr.rel (%p389) target = $region68
      $region67: #{mlp_forward.1} parent=59 // pred_region
        %s392 = smul.u32 16, %s19
        %p393 = scmp.lt.s32.totalorder %s392, 31
        %s394 = scalar_select %p393, %s392, 31
        %s395 = smul.addr %s394, 8
        %s396 = scalar_lea.vmem %s1, %s395
        %s397 = smul.u32 16, %s19
      $region68: #{mlp_forward.1} parent=59 // pred_fallthru
        _
    $region60: #{mlp_forward.1} parent=5 // pred_fallthru
      _
    %p398 = scmp.le.s32.totalorder 1, %s19
    %p399 = scmp.lt.s32.totalorder %s19, 3
    %p400 = pnand %p398, %p399
    %p401 = pneg %p400
    // Predicated region
    $region69: #{mlp_forward.1} parent=5 // pred_check
      _
    $region70: #{mlp_forward.1} parent=5 // pred_check_branch
      %403 = sbr.rel (%p400) target = $region72
    $region71: #{mlp_forward.1} parent=5 // pred_region
      %s404 = ssub.s32 %s19, 1
      %s405 = smul.u32 16, %s24
      %p406 = scmp.lt.s32.totalorder %s405, 31
      %s407 = scalar_select %p406, %s405, 31
      %s408 = smul.addr %s407, 4
      %s409 = scalar_lea.vmem %s0, %s408
      %p410 = pneg %p45
      %p411 = pneg %p42
      %s412 = smul.u32 16, %s24
      %p413 = scmp.lt.s32.totalorder %s412, 31
      %s414 = scalar_select %p413, %s412, 31
      %s415 = smul.addr %s414, 8
      %s416 = scalar_lea.vmem %s1, %s415
      %p417 = pneg %p71
      %p418 = pneg %p68
      %p419 = pneg %p92
      %p420 = pneg %p89
      %p421 = pneg %p113
      %p422 = pneg %p110
      %p423 = pneg %p134
      %p424 = pneg %p131
      %p425 = pneg %p155
      %p426 = pneg %p152
      %p427 = pneg %p176
      %p428 = pneg %p173
      %p429 = pneg %p197
      %p430 = pneg %p194
      %p431 = pneg %p218
      %p432 = pneg %p215
      %p433 = pneg %p239
      %p434 = pneg %p236
      %p435 = pneg %p260
      %p436 = pneg %p257
      %p437 = pneg %p281
      %p438 = pneg %p278
      %p439 = pneg %p302
      %p440 = pneg %p299
      %p441 = pneg %p328
      %p442 = pneg %p325
      %s443 = smul.u32 16, %s24
      %p444 = scmp.lt.s32.totalorder %s443, 31
      %s445 = scalar_select %p444, %s443, 31
      %s446 = smul.addr %s445, 8
      %s447 = scalar_lea.vmem %s13, %s446
      %s448 = smul.u32 16, %s24
      %p449 = scmp.lt.s32.totalorder %s448, 31
      %s450 = scalar_select %p449, %s448, 31
      %s451 = smul.addr %s450, 4
      %s452 = scalar_lea.vmem %s0, %s451
      %s453 = smul.u32 16, %s24
      %s454 = smul.u32 16, %s24
      %p455 = scmp.lt.s32.totalorder %s454, 31
      %s456 = scalar_select %p455, %s454, 31
      %s457 = smul.addr %s456, 8
      %s458 = scalar_lea.vmem %s1, %s457
      %s459 = smul.u32 16, %s24
      %s460 = smul.u32 16, %s24
      %p461 = scmp.lt.s32.totalorder %s460, 31
      %s462 = scalar_select %p461, %s460, 31
      %s463 = smul.addr %s462, 8
      %s464 = scalar_lea.vmem %s13, %s463
      %s465 = smul.u32 16, %s24
      %v467 = vld [vmem:[%s452] sm:$0xf]
      %v468 = vld [vmem:[%s452 + $0x4] sm:$0xf]
      %v469 = vld [vmem:[%s452 + $0x8] sm:$0xf]
      %v470 = vld [vmem:[%s452 + $0xc] sm:$0xf]
      %v471 = vld [vmem:[%s452 + $0x10] sm:$0xf]
      %v472 = vld [vmem:[%s452 + $0x14] sm:$0xf]
      %v473 = vld [vmem:[%s452 + $0x18] sm:$0xf]
      %v474 = vld [vmem:[%s452 + $0x1c] sm:$0xf]
      %v475 = vld [vmem:[%s452 + $0x20] sm:$0xf]
      %v476 = vld [vmem:[%s452 + $0x24] sm:$0xf]
      %v477 = vld [vmem:[%s452 + $0x28] sm:$0xf]
      %v478 = vld [vmem:[%s452 + $0x2c] sm:$0xf]
      %v479 = vld [vmem:[%s452 + $0x30] sm:$0xf]
      %v480 = vld [vmem:[%s452 + $0x34] sm:$0xf]
      %v481 = vld [vmem:[%s452 + $0x38] sm:$0xf]
      %v482 = vld [vmem:[%s452 + $0x3c] sm:$0xf]
      %v483 = vld [vmem:[%s2] sm:$0xf]
      %v484 = vld [vmem:[%s2 + $0x4] sm:$0xf]
      %v485 = vld [vmem:[%s2 + $0x8] sm:$0xf]
      %v486 = vld [vmem:[%s2 + $0xc] sm:$0xf]
      %v487 = vld [vmem:[%s2 + $0x10] sm:$0xf]
      %v488 = vld [vmem:[%s458] sm:$0xff]
      %v489 = vld [vmem:[%s458 + $0x8] sm:$0xff]
      %v490 = vld [vmem:[%s458 + $0x10] sm:$0xff]
      %v491 = vld [vmem:[%s458 + $0x18] sm:$0xff]
      %v492 = vld [vmem:[%s458 + $0x20] sm:$0xff]
      %v493 = vld [vmem:[%s458 + $0x28] sm:$0xff]
      %v494 = vld [vmem:[%s458 + $0x30] sm:$0xff]
      %v495 = vld [vmem:[%s458 + $0x38] sm:$0xff]
      %v496 = vld [vmem:[%s458 + $0x40] sm:$0xff]
      %v497 = vld [vmem:[%s458 + $0x48] sm:$0xff]
      %v498 = vld [vmem:[%s458 + $0x50] sm:$0xff]
      %v499 = vld [vmem:[%s458 + $0x58] sm:$0xff]
      %v500 = vld [vmem:[%s458 + $0x60] sm:$0xff]
      %v501 = vld [vmem:[%s458 + $0x68] sm:$0xff]
      %v502 = vld [vmem:[%s458 + $0x70] sm:$0xff]
      %v503 = vld [vmem:[%s458 + $0x78] sm:$0xff]
      %v504 = vld [vmem:[%s3] sm:$0x1]
      %506 = vset.pattern.permute.xlu0 0
      %507 = vperm.xlu0 %506, %v488
      %v508 = vpop.permute.xlu0 %507
      %511 = vset.pattern.permute.xlu0 0
      %512 = vperm.xlu0 %511, %v489
      %v513 = vpop.permute.xlu0 %512
      %516 = vset.pattern.permute.xlu0 0
      %517 = vperm.xlu0 %516, %v490
      %v518 = vpop.permute.xlu0 %517
      %521 = vset.pattern.permute.xlu0 0
      %522 = vperm.xlu0 %521, %v491
      %v523 = vpop.permute.xlu0 %522
      %526 = vset.pattern.permute.xlu0 0
      %527 = vperm.xlu0 %526, %v492
      %v528 = vpop.permute.xlu0 %527
      %531 = vset.pattern.permute.xlu0 0
      %532 = vperm.xlu0 %531, %v493
      %v533 = vpop.permute.xlu0 %532
      %536 = vset.pattern.permute.xlu0 0
      %537 = vperm.xlu0 %536, %v494
      %v538 = vpop.permute.xlu0 %537
      %541 = vset.pattern.permute.xlu0 0
      %542 = vperm.xlu0 %541, %v495
      %v543 = vpop.permute.xlu0 %542
      %546 = vset.pattern.permute.xlu0 0
      %547 = vperm.xlu0 %546, %v496
      %v548 = vpop.permute.xlu0 %547
      %551 = vset.pattern.permute.xlu0 0
      %552 = vperm.xlu0 %551, %v497
      %v553 = vpop.permute.xlu0 %552
      %556 = vset.pattern.permute.xlu0 0
      %557 = vperm.xlu0 %556, %v498
      %v558 = vpop.permute.xlu0 %557
      %561 = vset.pattern.permute.xlu0 0
      %562 = vperm.xlu0 %561, %v499
      %v563 = vpop.permute.xlu0 %562
      %566 = vset.pattern.permute.xlu0 0
      %567 = vperm.xlu0 %566, %v500
      %v568 = vpop.permute.xlu0 %567
      %571 = vset.pattern.permute.xlu0 0
      %572 = vperm.xlu0 %571, %v501
      %v573 = vpop.permute.xlu0 %572
      %576 = vset.pattern.permute.xlu0 0
      %577 = vperm.xlu0 %576, %v502
      %v578 = vpop.permute.xlu0 %577
      %581 = vset.pattern.permute.xlu0 0
      %582 = vperm.xlu0 %581, %v503
      %v583 = vpop.permute.xlu0 %582
      %v586 = vlaneseq
      %v587 = vshrl.u32 %v586, 7
      %v588 = vsub.s32 0, %v587
      %v589 = vrot.slane %v504, %v588
      %v591 = vmul.f32 %v508, %v589
      %v592 = vmul.f32 %v513, %v589
      %v593 = vmul.f32 %v518, %v589
      %v594 = vmul.f32 %v523, %v589
      %v595 = vmul.f32 %v528, %v589
      %v596 = vmul.f32 %v533, %v589
      %v597 = vmul.f32 %v538, %v589
      %v598 = vmul.f32 %v543, %v589
      %v599 = vmul.f32 %v548, %v589
      %v600 = vmul.f32 %v553, %v589
      %v601 = vmul.f32 %v558, %v589
      %v602 = vmul.f32 %v563, %v589
      %v603 = vmul.f32 %v568, %v589
      %v604 = vmul.f32 %v573, %v589
      %v605 = vmul.f32 %v578, %v589
      %v606 = vmul.f32 %v583, %v589
      %v623 = vunpack.c.l.b16 %v467
      %v624 = vunpack.c.l.b16 %v468
      %v625 = vunpack.c.l.b16 %v469
      %v626 = vunpack.c.l.b16 %v470
      %v627 = vunpack.c.l.b16 %v471
      %v628 = vunpack.c.l.b16 %v472
      %v629 = vunpack.c.l.b16 %v473
      %v630 = vunpack.c.l.b16 %v474
      %v631 = vunpack.c.l.b16 %v475
      %v632 = vunpack.c.l.b16 %v476
      %v633 = vunpack.c.l.b16 %v477
      %v634 = vunpack.c.l.b16 %v478
      %v635 = vunpack.c.l.b16 %v479
      %v636 = vunpack.c.l.b16 %v480
      %v637 = vunpack.c.l.b16 %v481
      %v638 = vunpack.c.l.b16 %v482
      %v639 = vpack.c.b16 %v624, %v623
      %v640 = vpack.c.b16 %v626, %v625
      %v641 = vpack.c.b16 %v628, %v627
      %v642 = vpack.c.b16 %v630, %v629
      %v643 = vpack.c.b16 %v632, %v631
      %v644 = vpack.c.b16 %v634, %v633
      %v645 = vpack.c.b16 %v636, %v635
      %v646 = vpack.c.b16 %v638, %v637
      %v652 = vunpack.c.l.b16 %v483
      %v653 = vunpack.c.l.b16 %v484
      %v654 = vunpack.c.l.b16 %v485
      %v655 = vunpack.c.l.b16 %v486
      %v656 = vunpack.c.l.b16 %v487
      %v657 = vpack.c.b16 %v653, %v652
      %v658 = vpack.c.b16 %v655, %v654
      %v659 = vpack.c.b16 %v656, %v656
      %vm662 = vcmask 326656
      %v664 = vsel %vm662, %v639, 0
      %v667 = vsel %vm662, %v640, 0
      %v670 = vsel %vm662, %v641, 0
      %v673 = vsel %vm662, %v642, 0
      %v676 = vsel %vm662, %v643, 0
      %v679 = vsel %vm662, %v644, 0
      %v682 = vsel %vm662, %v645, 0
      %v685 = vsel %vm662, %v646, 0
      %vm687 = vcmask 1043456
      %v689 = vsel %vm687, %v659, 0
      %691 = vmatprep.subr.bf16.mxu0 0
      %692 = vmatpush1.bf16.msra.mxu0 %v657
      %693 = vmatprep.subr.bf16.mxu0 0
      %694 = vmatpush1.bf16.msra.mxu0 %v658
      %695 = vmatprep.subr.bf16.mxu0 0
      %696 = vmatpush1.bf16.msra.mxu0 %v689
      %697 = vmatprep.subr.bf16.mxu0 0
      %698 = vmatpush1.bf16.msra.mxu0 0
      %699 = vmatprep.subr.bf16.mxu0 0
      %700 = vmatpush1.bf16.msra.mxu0 0
      %701 = vmatprep.subr.bf16.mxu0 0
      %702 = vmatpush1.bf16.msra.mxu0 0
      %703 = vmatprep.subr.bf16.mxu0 0
      %704 = vmatpush1.bf16.msra.mxu0 0
      %705 = vmatprep.subr.bf16.mxu0 0
      %706 = vmatpush1.bf16.msra.mxu0 0
      %707 = vmatprep.subr.bf16.mxu0 0
      %708 = vmatpush1.bf16.msra.mxu0 0
      %709 = vmatprep.subr.bf16.mxu0 0
      %710 = vmatpush1.bf16.msra.mxu0 0
      %711 = vmatprep.subr.bf16.mxu0 0
      %712 = vmatpush1.bf16.msra.mxu0 0
      %713 = vmatprep.subr.bf16.mxu0 0
      %714 = vmatpush1.bf16.msra.mxu0 0
      %715 = vmatprep.subr.bf16.mxu0 0
      %716 = vmatpush1.bf16.msra.mxu0 0
      %717 = vmatprep.subr.bf16.mxu0 0
      %718 = vmatpush1.bf16.msra.mxu0 0
      %719 = vmatprep.subr.bf16.mxu0 0
      %720 = vmatpush1.bf16.msra.mxu0 0
      %721 = vmatprep.subr.bf16.mxu0 0
      %722 = vmatpush1.bf16.msra.mxu0 0
      %723 = vmatprep.mubr.bf16.mxu0 0
      %724 = vmatmul.mubr.bf16.gmra.mrb[0].mxu0 %v664
      %v725 = vpop.f32.mrb[0].mxu0
      %v726 = vadd.f32 %v591, %v725
      %v727 = vpop.f32.mrb[0].mxu0
      %v728 = vpop.f32.mrb[0].mxu0
      %v729 = vadd.f32 %v592, %v728
      %v730 = vpop.f32.mrb[0].mxu0
      %731 = vmatprep.mubr.bf16.mxu0 0
      %732 = vmatmul.mubr.bf16.gmra.mrb[0].mxu0 %v667
      %v733 = vpop.f32.mrb[0].mxu0
      %v734 = vadd.f32 %v593, %v733
      %v735 = vpop.f32.mrb[0].mxu0
      %v736 = vpop.f32.mrb[0].mxu0
      %v737 = vadd.f32 %v594, %v736
      %v738 = vpop.f32.mrb[0].mxu0
      %739 = vmatprep.mubr.bf16.mxu0 0
      %740 = vmatmul.mubr.bf16.gmra.mrb[0].mxu0 %v670
      %v741 = vpop.f32.mrb[0].mxu0
      %v742 = vadd.f32 %v595, %v741
      %v743 = vpop.f32.mrb[0].mxu0
      %v744 = vpop.f32.mrb[0].mxu0
      %v745 = vadd.f32 %v596, %v744
      %v746 = vpop.f32.mrb[0].mxu0
      %747 = vmatprep.mubr.bf16.mxu0 0
      %748 = vmatmul.mubr.bf16.gmra.mrb[0].mxu0 %v673
      %v749 = vpop.f32.mrb[0].mxu0
      %v750 = vadd.f32 %v597, %v749
      %v751 = vpop.f32.mrb[0].mxu0
      %v752 = vpop.f32.mrb[0].mxu0
      %v753 = vadd.f32 %v598, %v752
      %v754 = vpop.f32.mrb[0].mxu0
      %755 = vmatprep.mubr.bf16.mxu0 0
      %756 = vmatmul.mubr.bf16.gmra.mrb[0].mxu0 %v676
      %v757 = vpop.f32.mrb[0].mxu0
      %v758 = vadd.f32 %v599, %v757
      %v759 = vpop.f32.mrb[0].mxu0
      %v760 = vpop.f32.mrb[0].mxu0
      %v761 = vadd.f32 %v600, %v760
      %v762 = vpop.f32.mrb[0].mxu0
      %763 = vmatprep.mubr.bf16.mxu0 0
      %764 = vmatmul.mubr.bf16.gmra.mrb[0].mxu0 %v679
      %v765 = vpop.f32.mrb[0].mxu0
      %v766 = vadd.f32 %v601, %v765
      %v767 = vpop.f32.mrb[0].mxu0
      %v768 = vpop.f32.mrb[0].mxu0
      %v769 = vadd.f32 %v602, %v768
      %v770 = vpop.f32.mrb[0].mxu0
      %771 = vmatprep.mubr.bf16.mxu0 0
      %772 = vmatmul.mubr.bf16.gmra.mrb[0].mxu0 %v682
      %v773 = vpop.f32.mrb[0].mxu0
      %v774 = vadd.f32 %v603, %v773
      %v775 = vpop.f32.mrb[0].mxu0
      %v776 = vpop.f32.mrb[0].mxu0
      %v777 = vadd.f32 %v604, %v776
      %v778 = vpop.f32.mrb[0].mxu0
      %779 = vmatprep.mubr.bf16.mxu0 0
      %780 = vmatmul.mubr.bf16.gmra.mrb[0].mxu0 %v685
      %v781 = vpop.f32.mrb[0].mxu0
      %v782 = vadd.f32 %v605, %v781
      %v783 = vpop.f32.mrb[0].mxu0
      %v784 = vpop.f32.mrb[0].mxu0
      %v785 = vadd.f32 %v606, %v784
      %v786 = vpop.f32.mrb[0].mxu0
      %787 = vdwg.mxu0
      %v788 = vld [vmem:[%s4] sm:$0x1]
      %v790 = vlaneseq
      %v791 = vshrl.u32 %v790, 7
      %v792 = vsub.s32 0, %v791
      %v793 = vrot.slane %v788, %v792
      %v795 = vadd.f32 %v726, %v793
      %v796 = vadd.f32 %v729, %v793
      %v797 = vadd.f32 %v734, %v793
      %v798 = vadd.f32 %v737, %v793
      %v799 = vadd.f32 %v742, %v793
      %v800 = vadd.f32 %v745, %v793
      %v801 = vadd.f32 %v750, %v793
      %v802 = vadd.f32 %v753, %v793
      %v803 = vadd.f32 %v758, %v793
      %v804 = vadd.f32 %v761, %v793
      %v805 = vadd.f32 %v766, %v793
      %v806 = vadd.f32 %v769, %v793
      %v807 = vadd.f32 %v774, %v793
      %v808 = vadd.f32 %v777, %v793
      %v809 = vadd.f32 %v782, %v793
      %v810 = vadd.f32 %v785, %v793
      %v811 = vsub.f32 0.0, %v795
      %v812 = vsub.f32 0.0, %v796
      %v813 = vsub.f32 0.0, %v797
      %v814 = vsub.f32 0.0, %v798
      %v815 = vsub.f32 0.0, %v799
      %v816 = vsub.f32 0.0, %v800
      %v817 = vsub.f32 0.0, %v801
      %v818 = vsub.f32 0.0, %v802
      %v819 = vsub.f32 0.0, %v803
      %v820 = vsub.f32 0.0, %v804
      %v821 = vsub.f32 0.0, %v805
      %v822 = vsub.f32 0.0, %v806
      %v823 = vsub.f32 0.0, %v807
      %v824 = vsub.f32 0.0, %v808
      %v825 = vsub.f32 0.0, %v809
      %v826 = vsub.f32 0.0, %v810
      %v827 = vmul.f32 %v811, 1.442695
      %v828 = vpow.pop %v827
      %v829 = vmul.f32 %v812, 1.442695
      %v830 = vpow.pop %v829
      %v831 = vmul.f32 %v813, 1.442695
      %v832 = vpow.pop %v831
      %v833 = vmul.f32 %v814, 1.442695
      %v834 = vpow.pop %v833
      %v835 = vmul.f32 %v815, 1.442695
      %v836 = vpow.pop %v835
      %v837 = vmul.f32 %v816, 1.442695
      %v838 = vpow.pop %v837
      %v839 = vmul.f32 %v817, 1.442695
      %v840 = vpow.pop %v839
      %v841 = vmul.f32 %v818, 1.442695
      %v842 = vpow.pop %v841
      %v843 = vmul.f32 %v819, 1.442695
      %v844 = vpow.pop %v843
      %v845 = vmul.f32 %v820, 1.442695
      %v846 = vpow.pop %v845
      %v847 = vmul.f32 %v821, 1.442695
      %v848 = vpow.pop %v847
      %v849 = vmul.f32 %v822, 1.442695
      %v850 = vpow.pop %v849
      %v851 = vmul.f32 %v823, 1.442695
      %v852 = vpow.pop %v851
      %v853 = vmul.f32 %v824, 1.442695
      %v854 = vpow.pop %v853
      %v855 = vmul.f32 %v825, 1.442695
      %v856 = vpow.pop %v855
      %v857 = vmul.f32 %v826, 1.442695
      %v858 = vpow.pop %v857
      %v859 = vadd.f32 %v828, 1.0
      %v860 = vadd.f32 %v830, 1.0
      %v861 = vadd.f32 %v832, 1.0
      %v862 = vadd.f32 %v834, 1.0
      %v863 = vadd.f32 %v836, 1.0
      %v864 = vadd.f32 %v838, 1.0
      %v865 = vadd.f32 %v840, 1.0
      %v866 = vadd.f32 %v842, 1.0
      %v867 = vadd.f32 %v844, 1.0
      %v868 = vadd.f32 %v846, 1.0
      %v869 = vadd.f32 %v848, 1.0
      %v870 = vadd.f32 %v850, 1.0
      %v871 = vadd.f32 %v852, 1.0
      %v872 = vadd.f32 %v854, 1.0
      %v873 = vadd.f32 %v856, 1.0
      %v874 = vadd.f32 %v858, 1.0
      %v875 = vrcp.pop %v859
      %v876 = vrcp.pop %v860
      %v877 = vrcp.pop %v861
      %v878 = vrcp.pop %v862
      %v879 = vrcp.pop %v863
      %v880 = vrcp.pop %v864
      %v881 = vrcp.pop %v865
      %v882 = vrcp.pop %v866
      %v883 = vrcp.pop %v867
      %v884 = vrcp.pop %v868
      %v885 = vrcp.pop %v869
      %v886 = vrcp.pop %v870
      %v887 = vrcp.pop %v871
      %v888 = vrcp.pop %v872
      %v889 = vrcp.pop %v873
      %v890 = vrcp.pop %v874
      %v891 = vmul.f32 %v795, %v875
      %v892 = vmul.f32 %v796, %v876
      %v893 = vmul.f32 %v797, %v877
      %v894 = vmul.f32 %v798, %v878
      %v895 = vmul.f32 %v799, %v879
      %v896 = vmul.f32 %v800, %v880
      %v897 = vmul.f32 %v801, %v881
      %v898 = vmul.f32 %v802, %v882
      %v899 = vmul.f32 %v803, %v883
      %v900 = vmul.f32 %v804, %v884
      %v901 = vmul.f32 %v805, %v885
      %v902 = vmul.f32 %v806, %v886
      %v903 = vmul.f32 %v807, %v887
      %v904 = vmul.f32 %v808, %v888
      %v905 = vmul.f32 %v809, %v889
      %v906 = vmul.f32 %v810, %v890
      %v907 = vpack.c.bf16 %v892, %v891
      %v908 = vpack.c.bf16 %v894, %v893
      %v909 = vpack.c.bf16 %v896, %v895
      %v910 = vpack.c.bf16 %v898, %v897
      %v911 = vpack.c.bf16 %v900, %v899
      %v912 = vpack.c.bf16 %v902, %v901
      %v913 = vpack.c.bf16 %v904, %v903
      %v914 = vpack.c.bf16 %v906, %v905
      %v915 = vld [vmem:[%s5] sm:$0xf]
      %v916 = vld [vmem:[%s5 + $0x4] sm:$0xf]
      %v917 = vld [vmem:[%s5 + $0x8] sm:$0xf]
      %v918 = vld [vmem:[%s5 + $0xc] sm:$0xf]
      %v919 = vld [vmem:[%s5 + $0x10] sm:$0xf]
      %v920 = vld [vmem:[%s5 + $0x14] sm:$0xf]
      %v921 = vld [vmem:[%s5 + $0x18] sm:$0xf]
      %v922 = vld [vmem:[%s5 + $0x1c] sm:$0xf]
      %v923 = vld [vmem:[%s5 + $0x20] sm:$0xf]
      %v924 = vld [vmem:[%s5 + $0x24] sm:$0xf]
      %v925 = vld [vmem:[%s5 + $0x28] sm:$0xf]
      %v926 = vld [vmem:[%s5 + $0x2c] sm:$0xf]
      %v927 = vld [vmem:[%s5 + $0x30] sm:$0xf]
      %v928 = vld [vmem:[%s5 + $0x34] sm:$0xf]
      %v929 = vld [vmem:[%s5 + $0x38] sm:$0xf]
      %v930 = vld [vmem:[%s5 + $0x3c] sm:$0xf]
      %v931 = vld [vmem:[%s6] sm:$0x1]
      %v933 = vlaneseq
      %v934 = vshrl.u32 %v933, 7
      %v935 = vsub.s32 0, %v934
      %v936 = vrot.slane %v931, %v935
      %v954 = vunpack.c.l.b16 %v915
      %v955 = vunpack.c.l.b16 %v916
      %v956 = vunpack.c.l.b16 %v917
      %v957 = vunpack.c.l.b16 %v918
      %v958 = vunpack.c.l.b16 %v919
      %v959 = vunpack.c.l.b16 %v920
      %v960 = vunpack.c.l.b16 %v921
      %v961 = vunpack.c.l.b16 %v922
      %v962 = vunpack.c.l.b16 %v923
      %v963 = vunpack.c.l.b16 %v924
      %v964 = vunpack.c.l.b16 %v925
      %v965 = vunpack.c.l.b16 %v926
      %v966 = vunpack.c.l.b16 %v927
      %v967 = vunpack.c.l.b16 %v928
      %v968 = vunpack.c.l.b16 %v929
      %v969 = vunpack.c.l.b16 %v930
      %v970 = vpack.c.b16 %v955, %v954
      %v971 = vpack.c.b16 %v957, %v956
      %v972 = vpack.c.b16 %v959, %v958
      %v973 = vpack.c.b16 %v961, %v960
      %v974 = vpack.c.b16 %v963, %v962
      %v975 = vpack.c.b16 %v965, %v964
      %v976 = vpack.c.b16 %v967, %v966
      %v977 = vpack.c.b16 %v969, %v968
      %986 = vmatprep.subr.bf16.mxu0 0
      %987 = vmatpush1.bf16.msra.mxu0 %v970
      %988 = vmatprep.subr.bf16.mxu0 0
      %989 = vmatpush1.bf16.msra.mxu0 %v971
      %990 = vmatprep.subr.bf16.mxu0 0
      %991 = vmatpush1.bf16.msra.mxu0 %v972
      %992 = vmatprep.subr.bf16.mxu0 0
      %993 = vmatpush1.bf16.msra.mxu0 %v973
      %994 = vmatprep.subr.bf16.mxu0 0
      %995 = vmatpush1.bf16.msra.mxu0 %v974
      %996 = vmatprep.subr.bf16.mxu0 0
      %997 = vmatpush1.bf16.msra.mxu0 %v975
      %998 = vmatprep.subr.bf16.mxu0 0
      %999 = vmatpush1.bf16.msra.mxu0 %v976
      %1000 = vmatprep.subr.bf16.mxu0 0
      %1001 = vmatpush1.bf16.msra.mxu0 %v977
      %1002 = vmatprep.subr.bf16.mxu0 0
      %1003 = vmatpush1.bf16.msra.mxu0 0
      %1004 = vmatprep.subr.bf16.mxu0 0
      %1005 = vmatpush1.bf16.msra.mxu0 0
      %1006 = vmatprep.subr.bf16.mxu0 0
      %1007 = vmatpush1.bf16.msra.mxu0 0
      %1008 = vmatprep.subr.bf16.mxu0 0
      %1009 = vmatpush1.bf16.msra.mxu0 0
      %1010 = vmatprep.subr.bf16.mxu0 0
      %1011 = vmatpush1.bf16.msra.mxu0 0
      %1012 = vmatprep.subr.bf16.mxu0 0
      %1013 = vmatpush1.bf16.msra.mxu0 0
      %1014 = vmatprep.subr.bf16.mxu0 0
      %1015 = vmatpush1.bf16.msra.mxu0 0
      %1016 = vmatprep.subr.bf16.mxu0 0
      %1017 = vmatpush1.bf16.msra.mxu0 0
      %1018 = vmatprep.mubr.bf16.mxu0 0
      %1019 = vmatmul.mubr.bf16.gmra.mrb[0].mxu0 %v907
      %v1020 = vpop.f32.mrb[0].mxu0
      %v1021 = vadd.f32 %v936, %v1020
      %v1022 = vpop.f32.mrb[0].mxu0
      %v1023 = vpop.f32.mrb[0].mxu0
      %v1024 = vadd.f32 %v936, %v1023
      %v1025 = vpop.f32.mrb[0].mxu0
      %1026 = vmatprep.mubr.bf16.mxu0 0
      %1027 = vmatmul.mubr.bf16.gmra.mrb[0].mxu0 %v908
      %v1028 = vpop.f32.mrb[0].mxu0
      %v1029 = vadd.f32 %v936, %v1028
      %v1030 = vpop.f32.mrb[0].mxu0
      %v1031 = vpop.f32.mrb[0].mxu0
      %v1032 = vadd.f32 %v936, %v1031
      %v1033 = vpop.f32.mrb[0].mxu0
      %1034 = vmatprep.mubr.bf16.mxu0 0
      %1035 = vmatmul.mubr.bf16.gmra.mrb[0].mxu0 %v909
      %v1036 = vpop.f32.mrb[0].mxu0
      %v1037 = vadd.f32 %v936, %v1036
      %v1038 = vpop.f32.mrb[0].mxu0
      %v1039 = vpop.f32.mrb[0].mxu0
      %v1040 = vadd.f32 %v936, %v1039
      %v1041 = vpop.f32.mrb[0].mxu0
      %1042 = vmatprep.mubr.bf16.mxu0 0
      %1043 = vmatmul.mubr.bf16.gmra.mrb[0].mxu0 %v910
      %v1044 = vpop.f32.mrb[0].mxu0
      %v1045 = vadd.f32 %v936, %v1044
      %v1046 = vpop.f32.mrb[0].mxu0
      %v1047 = vpop.f32.mrb[0].mxu0
      %v1048 = vadd.f32 %v936, %v1047
      %v1049 = vpop.f32.mrb[0].mxu0
      %1050 = vmatprep.mubr.bf16.mxu0 0
      %1051 = vmatmul.mubr.bf16.gmra.mrb[0].mxu0 %v911
      %v1052 = vpop.f32.mrb[0].mxu0
      %v1053 = vadd.f32 %v936, %v1052
      %v1054 = vpop.f32.mrb[0].mxu0
      %v1055 = vpop.f32.mrb[0].mxu0
      %v1056 = vadd.f32 %v936, %v1055
      %v1057 = vpop.f32.mrb[0].mxu0
      %1058 = vmatprep.mubr.bf16.mxu0 0
      %1059 = vmatmul.mubr.bf16.gmra.mrb[0].mxu0 %v912
      %v1060 = vpop.f32.mrb[0].mxu0
      %v1061 = vadd.f32 %v936, %v1060
      %v1062 = vpop.f32.mrb[0].mxu0
      %v1063 = vpop.f32.mrb[0].mxu0
      %v1064 = vadd.f32 %v936, %v1063
      %v1065 = vpop.f32.mrb[0].mxu0
      %1066 = vmatprep.mubr.bf16.mxu0 0
      %1067 = vmatmul.mubr.bf16.gmra.mrb[0].mxu0 %v913
      %v1068 = vpop.f32.mrb[0].mxu0
      %v1069 = vadd.f32 %v936, %v1068
      %v1070 = vpop.f32.mrb[0].mxu0
      %v1071 = vpop.f32.mrb[0].mxu0
      %v1072 = vadd.f32 %v936, %v1071
      %v1073 = vpop.f32.mrb[0].mxu0
      %1074 = vmatprep.mubr.bf16.mxu0 0
      %1075 = vmatmul.mubr.bf16.gmra.mrb[0].mxu0 %v914
      %v1076 = vpop.f32.mrb[0].mxu0
      %v1077 = vadd.f32 %v936, %v1076
      %v1078 = vpop.f32.mrb[0].mxu0
      %v1079 = vpop.f32.mrb[0].mxu0
      %v1080 = vadd.f32 %v936, %v1079
      %v1081 = vpop.f32.mrb[0].mxu0
      %1082 = vdwg.mxu0
      %v1083 = vsub.f32 0.0, %v1021
      %v1084 = vsub.f32 0.0, %v1024
      %v1085 = vsub.f32 0.0, %v1029
      %v1086 = vsub.f32 0.0, %v1032
      %v1087 = vsub.f32 0.0, %v1037
      %v1088 = vsub.f32 0.0, %v1040
      %v1089 = vsub.f32 0.0, %v1045
      %v1090 = vsub.f32 0.0, %v1048
      %v1091 = vsub.f32 0.0, %v1053
      %v1092 = vsub.f32 0.0, %v1056
      %v1093 = vsub.f32 0.0, %v1061
      %v1094 = vsub.f32 0.0, %v1064
      %v1095 = vsub.f32 0.0, %v1069
      %v1096 = vsub.f32 0.0, %v1072
      %v1097 = vsub.f32 0.0, %v1077
      %v1098 = vsub.f32 0.0, %v1080
      %v1099 = vmul.f32 %v1083, 1.442695
      %v1100 = vpow.pop %v1099
      %v1101 = vmul.f32 %v1084, 1.442695
      %v1102 = vpow.pop %v1101
      %v1103 = vmul.f32 %v1085, 1.442695
      %v1104 = vpow.pop %v1103
      %v1105 = vmul.f32 %v1086, 1.442695
      %v1106 = vpow.pop %v1105
      %v1107 = vmul.f32 %v1087, 1.442695
      %v1108 = vpow.pop %v1107
      %v1109 = vmul.f32 %v1088, 1.442695
      %v1110 = vpow.pop %v1109
      %v1111 = vmul.f32 %v1089, 1.442695
      %v1112 = vpow.pop %v1111
      %v1113 = vmul.f32 %v1090, 1.442695
      %v1114 = vpow.pop %v1113
      %v1115 = vmul.f32 %v1091, 1.442695
      %v1116 = vpow.pop %v1115
      %v1117 = vmul.f32 %v1092, 1.442695
      %v1118 = vpow.pop %v1117
      %v1119 = vmul.f32 %v1093, 1.442695
      %v1120 = vpow.pop %v1119
      %v1121 = vmul.f32 %v1094, 1.442695
      %v1122 = vpow.pop %v1121
      %v1123 = vmul.f32 %v1095, 1.442695
      %v1124 = vpow.pop %v1123
      %v1125 = vmul.f32 %v1096, 1.442695
      %v1126 = vpow.pop %v1125
      %v1127 = vmul.f32 %v1097, 1.442695
      %v1128 = vpow.pop %v1127
      %v1129 = vmul.f32 %v1098, 1.442695
      %v1130 = vpow.pop %v1129
      %v1131 = vadd.f32 %v1100, 1.0
      %v1132 = vadd.f32 %v1102, 1.0
      %v1133 = vadd.f32 %v1104, 1.0
      %v1134 = vadd.f32 %v1106, 1.0
      %v1135 = vadd.f32 %v1108, 1.0
      %v1136 = vadd.f32 %v1110, 1.0
      %v1137 = vadd.f32 %v1112, 1.0
      %v1138 = vadd.f32 %v1114, 1.0
      %v1139 = vadd.f32 %v1116, 1.0
      %v1140 = vadd.f32 %v1118, 1.0
      %v1141 = vadd.f32 %v1120, 1.0
      %v1142 = vadd.f32 %v1122, 1.0
      %v1143 = vadd.f32 %v1124, 1.0
      %v1144 = vadd.f32 %v1126, 1.0
      %v1145 = vadd.f32 %v1128, 1.0
      %v1146 = vadd.f32 %v1130, 1.0
      %v1147 = vrcp.pop %v1131
      %v1148 = vrcp.pop %v1132
      %v1149 = vrcp.pop %v1133
      %v1150 = vrcp.pop %v1134
      %v1151 = vrcp.pop %v1135
      %v1152 = vrcp.pop %v1136
      %v1153 = vrcp.pop %v1137
      %v1154 = vrcp.pop %v1138
      %v1155 = vrcp.pop %v1139
      %v1156 = vrcp.pop %v1140
      %v1157 = vrcp.pop %v1141
      %v1158 = vrcp.pop %v1142
      %v1159 = vrcp.pop %v1143
      %v1160 = vrcp.pop %v1144
      %v1161 = vrcp.pop %v1145
      %v1162 = vrcp.pop %v1146
      %v1163 = vmul.f32 %v1021, %v1147
      %v1164 = vmul.f32 %v1024, %v1148
      %v1165 = vmul.f32 %v1029, %v1149
      %v1166 = vmul.f32 %v1032, %v1150
      %v1167 = vmul.f32 %v1037, %v1151
      %v1168 = vmul.f32 %v1040, %v1152
      %v1169 = vmul.f32 %v1045, %v1153
      %v1170 = vmul.f32 %v1048, %v1154
      %v1171 = vmul.f32 %v1053, %v1155
      %v1172 = vmul.f32 %v1056, %v1156
      %v1173 = vmul.f32 %v1061, %v1157
      %v1174 = vmul.f32 %v1064, %v1158
      %v1175 = vmul.f32 %v1069, %v1159
      %v1176 = vmul.f32 %v1072, %v1160
      %v1177 = vmul.f32 %v1077, %v1161
      %v1178 = vmul.f32 %v1080, %v1162
      %v1179 = vpack.c.bf16 %v1164, %v1163
      %v1180 = vpack.c.bf16 %v1166, %v1165
      %v1181 = vpack.c.bf16 %v1168, %v1167
      %v1182 = vpack.c.bf16 %v1170, %v1169
      %v1183 = vpack.c.bf16 %v1172, %v1171
      %v1184 = vpack.c.bf16 %v1174, %v1173
      %v1185 = vpack.c.bf16 %v1176, %v1175
      %v1186 = vpack.c.bf16 %v1178, %v1177
      %v1187 = vld [vmem:[%s7] sm:$0xf]
      %v1188 = vld [vmem:[%s7 + $0x4] sm:$0xf]
      %v1189 = vld [vmem:[%s7 + $0x8] sm:$0xf]
      %v1190 = vld [vmem:[%s7 + $0xc] sm:$0xf]
      %v1191 = vld [vmem:[%s7 + $0x10] sm:$0xf]
      %v1192 = vld [vmem:[%s7 + $0x14] sm:$0xf]
      %v1193 = vld [vmem:[%s7 + $0x18] sm:$0xf]
      %v1194 = vld [vmem:[%s7 + $0x1c] sm:$0xf]
      %v1195 = vld [vmem:[%s7 + $0x20] sm:$0xf]
      %v1196 = vld [vmem:[%s7 + $0x24] sm:$0xf]
      %v1197 = vld [vmem:[%s7 + $0x28] sm:$0xf]
      %v1198 = vld [vmem:[%s7 + $0x2c] sm:$0xf]
      %v1199 = vld [vmem:[%s7 + $0x30] sm:$0xf]
      %v1200 = vld [vmem:[%s7 + $0x34] sm:$0xf]
      %v1201 = vld [vmem:[%s7 + $0x38] sm:$0xf]
      %v1202 = vld [vmem:[%s7 + $0x3c] sm:$0xf]
      %v1203 = vld [vmem:[%s8] sm:$0x1]
      %v1205 = vlaneseq
      %v1206 = vshrl.u32 %v1205, 7
      %v1207 = vsub.s32 0, %v1206
      %v1208 = vrot.slane %v1203, %v1207
      %v1226 = vunpack.c.l.b16 %v1187
      %v1227 = vunpack.c.l.b16 %v1188
      %v1228 = vunpack.c.l.b16 %v1189
      %v1229 = vunpack.c.l.b16 %v1190
      %v1230 = vunpack.c.l.b16 %v1191
      %v1231 = vunpack.c.l.b16 %v1192
      %v1232 = vunpack.c.l.b16 %v1193
      %v1233 = vunpack.c.l.b16 %v1194
      %v1234 = vunpack.c.l.b16 %v1195
      %v1235 = vunpack.c.l.b16 %v1196
      %v1236 = vunpack.c.l.b16 %v1197
      %v1237 = vunpack.c.l.b16 %v1198
      %v1238 = vunpack.c.l.b16 %v1199
      %v1239 = vunpack.c.l.b16 %v1200
      %v1240 = vunpack.c.l.b16 %v1201
      %v1241 = vunpack.c.l.b16 %v1202
      %v1242 = vpack.c.b16 %v1227, %v1226
      %v1243 = vpack.c.b16 %v1229, %v1228
      %v1244 = vpack.c.b16 %v1231, %v1230
      %v1245 = vpack.c.b16 %v1233, %v1232
      %v1246 = vpack.c.b16 %v1235, %v1234
      %v1247 = vpack.c.b16 %v1237, %v1236
      %v1248 = vpack.c.b16 %v1239, %v1238
      %v1249 = vpack.c.b16 %v1241, %v1240
      %1258 = vmatprep.subr.bf16.mxu0 0
      %1259 = vmatpush1.bf16.msra.mxu0 %v1242
      %1260 = vmatprep.subr.bf16.mxu0 0
      %1261 = vmatpush1.bf16.msra.mxu0 %v1243
      %1262 = vmatprep.subr.bf16.mxu0 0
      %1263 = vmatpush1.bf16.msra.mxu0 %v1244
      %1264 = vmatprep.subr.bf16.mxu0 0
      %1265 = vmatpush1.bf16.msra.mxu0 %v1245
      %1266 = vmatprep.subr.bf16.mxu0 0
      %1267 = vmatpush1.bf16.msra.mxu0 %v1246
      %1268 = vmatprep.subr.bf16.mxu0 0
      %1269 = vmatpush1.bf16.msra.mxu0 %v1247
      %1270 = vmatprep.subr.bf16.mxu0 0
      %1271 = vmatpush1.bf16.msra.mxu0 %v1248
      %1272 = vmatprep.subr.bf16.mxu0 0
      %1273 = vmatpush1.bf16.msra.mxu0 %v1249
      %1274 = vmatprep.subr.bf16.mxu0 0
      %1275 = vmatpush1.bf16.msra.mxu0 0
      %1276 = vmatprep.subr.bf16.mxu0 0
      %1277 = vmatpush1.bf16.msra.mxu0 0
      %1278 = vmatprep.subr.bf16.mxu0 0
      %1279 = vmatpush1.bf16.msra.mxu0 0
      %1280 = vmatprep.subr.bf16.mxu0 0
      %1281 = vmatpush1.bf16.msra.mxu0 0
      %1282 = vmatprep.subr.bf16.mxu0 0
      %1283 = vmatpush1.bf16.msra.mxu0 0
      %1284 = vmatprep.subr.bf16.mxu0 0
      %1285 = vmatpush1.bf16.msra.mxu0 0
      %1286 = vmatprep.subr.bf16.mxu0 0
      %1287 = vmatpush1.bf16.msra.mxu0 0
      %1288 = vmatprep.subr.bf16.mxu0 0
      %1289 = vmatpush1.bf16.msra.mxu0 0
      %1290 = vmatprep.mubr.bf16.mxu0 0
      %1291 = vmatmul.mubr.bf16.gmra.mrb[0].mxu0 %v1179
      %v1292 = vpop.f32.mrb[0].mxu0
      %v1293 = vadd.f32 %v1208, %v1292
      %v1294 = vpop.f32.mrb[0].mxu0
      %v1295 = vpop.f32.mrb[0].mxu0
      %v1296 = vadd.f32 %v1208, %v1295
      %v1297 = vpop.f32.mrb[0].mxu0
      %1298 = vmatprep.mubr.bf16.mxu0 0
      %1299 = vmatmul.mubr.bf16.gmra.mrb[0].mxu0 %v1180
      %v1300 = vpop.f32.mrb[0].mxu0
      %v1301 = vadd.f32 %v1208, %v1300
      %v1302 = vpop.f32.mrb[0].mxu0
      %v1303 = vpop.f32.mrb[0].mxu0
      %v1304 = vadd.f32 %v1208, %v1303
      %v1305 = vpop.f32.mrb[0].mxu0
      %1306 = vmatprep.mubr.bf16.mxu0 0
      %1307 = vmatmul.mubr.bf16.gmra.mrb[0].mxu0 %v1181
      %v1308 = vpop.f32.mrb[0].mxu0
      %v1309 = vadd.f32 %v1208, %v1308
      %v1310 = vpop.f32.mrb[0].mxu0
      %v1311 = vpop.f32.mrb[0].mxu0
      %v1312 = vadd.f32 %v1208, %v1311
      %v1313 = vpop.f32.mrb[0].mxu0
      %1314 = vmatprep.mubr.bf16.mxu0 0
      %1315 = vmatmul.mubr.bf16.gmra.mrb[0].mxu0 %v1182
      %v1316 = vpop.f32.mrb[0].mxu0
      %v1317 = vadd.f32 %v1208, %v1316
      %v1318 = vpop.f32.mrb[0].mxu0
      %v1319 = vpop.f32.mrb[0].mxu0
      %v1320 = vadd.f32 %v1208, %v1319
      %v1321 = vpop.f32.mrb[0].mxu0
      %1322 = vmatprep.mubr.bf16.mxu0 0
      %1323 = vmatmul.mubr.bf16.gmra.mrb[0].mxu0 %v1183
      %v1324 = vpop.f32.mrb[0].mxu0
      %v1325 = vadd.f32 %v1208, %v1324
      %v1326 = vpop.f32.mrb[0].mxu0
      %v1327 = vpop.f32.mrb[0].mxu0
      %v1328 = vadd.f32 %v1208, %v1327
      %v1329 = vpop.f32.mrb[0].mxu0
      %1330 = vmatprep.mubr.bf16.mxu0 0
      %1331 = vmatmul.mubr.bf16.gmra.mrb[0].mxu0 %v1184
      %v1332 = vpop.f32.mrb[0].mxu0
      %v1333 = vadd.f32 %v1208, %v1332
      %v1334 = vpop.f32.mrb[0].mxu0
      %v1335 = vpop.f32.mrb[0].mxu0
      %v1336 = vadd.f32 %v1208, %v1335
      %v1337 = vpop.f32.mrb[0].mxu0
      %1338 = vmatprep.mubr.bf16.mxu0 0
      %1339 = vmatmul.mubr.bf16.gmra.mrb[0].mxu0 %v1185
      %v1340 = vpop.f32.mrb[0].mxu0
      %v1341 = vadd.f32 %v1208, %v1340
      %v1342 = vpop.f32.mrb[0].mxu0
      %v1343 = vpop.f32.mrb[0].mxu0
      %v1344 = vadd.f32 %v1208, %v1343
      %v1345 = vpop.f32.mrb[0].mxu0
      %1346 = vmatprep.mubr.bf16.mxu0 0
      %1347 = vmatmul.mubr.bf16.gmra.mrb[0].mxu0 %v1186
      %v1348 = vpop.f32.mrb[0].mxu0
      %v1349 = vadd.f32 %v1208, %v1348
      %v1350 = vpop.f32.mrb[0].mxu0
      %v1351 = vpop.f32.mrb[0].mxu0
      %v1352 = vadd.f32 %v1208, %v1351
      %v1353 = vpop.f32.mrb[0].mxu0
      %1354 = vdwg.mxu0
      %v1355 = vsub.f32 0.0, %v1293
      %v1356 = vsub.f32 0.0, %v1296
      %v1357 = vsub.f32 0.0, %v1301
      %v1358 = vsub.f32 0.0, %v1304
      %v1359 = vsub.f32 0.0, %v1309
      %v1360 = vsub.f32 0.0, %v1312
      %v1361 = vsub.f32 0.0, %v1317
      %v1362 = vsub.f32 0.0, %v1320
      %v1363 = vsub.f32 0.0, %v1325
      %v1364 = vsub.f32 0.0, %v1328
      %v1365 = vsub.f32 0.0, %v1333
      %v1366 = vsub.f32 0.0, %v1336
      %v1367 = vsub.f32 0.0, %v1341
      %v1368 = vsub.f32 0.0, %v1344
      %v1369 = vsub.f32 0.0, %v1349
      %v1370 = vsub.f32 0.0, %v1352
      %v1371 = vmul.f32 %v1355, 1.442695
      %v1372 = vpow.pop %v1371
      %v1373 = vmul.f32 %v1356, 1.442695
      %v1374 = vpow.pop %v1373
      %v1375 = vmul.f32 %v1357, 1.442695
      %v1376 = vpow.pop %v1375
      %v1377 = vmul.f32 %v1358, 1.442695
      %v1378 = vpow.pop %v1377
      %v1379 = vmul.f32 %v1359, 1.442695
      %v1380 = vpow.pop %v1379
      %v1381 = vmul.f32 %v1360, 1.442695
      %v1382 = vpow.pop %v1381
      %v1383 = vmul.f32 %v1361, 1.442695
      %v1384 = vpow.pop %v1383
      %v1385 = vmul.f32 %v1362, 1.442695
      %v1386 = vpow.pop %v1385
      %v1387 = vmul.f32 %v1363, 1.442695
      %v1388 = vpow.pop %v1387
      %v1389 = vmul.f32 %v1364, 1.442695
      %v1390 = vpow.pop %v1389
      %v1391 = vmul.f32 %v1365, 1.442695
      %v1392 = vpow.pop %v1391
      %v1393 = vmul.f32 %v1366, 1.442695
      %v1394 = vpow.pop %v1393
      %v1395 = vmul.f32 %v1367, 1.442695
      %v1396 = vpow.pop %v1395
      %v1397 = vmul.f32 %v1368, 1.442695
      %v1398 = vpow.pop %v1397
      %v1399 = vmul.f32 %v1369, 1.442695
      %v1400 = vpow.pop %v1399
      %v1401 = vmul.f32 %v1370, 1.442695
      %v1402 = vpow.pop %v1401
      %v1403 = vadd.f32 %v1372, 1.0
      %v1404 = vadd.f32 %v1374, 1.0
      %v1405 = vadd.f32 %v1376, 1.0
      %v1406 = vadd.f32 %v1378, 1.0
      %v1407 = vadd.f32 %v1380, 1.0
      %v1408 = vadd.f32 %v1382, 1.0
      %v1409 = vadd.f32 %v1384, 1.0
      %v1410 = vadd.f32 %v1386, 1.0
      %v1411 = vadd.f32 %v1388, 1.0
      %v1412 = vadd.f32 %v1390, 1.0
      %v1413 = vadd.f32 %v1392, 1.0
      %v1414 = vadd.f32 %v1394, 1.0
      %v1415 = vadd.f32 %v1396, 1.0
      %v1416 = vadd.f32 %v1398, 1.0
      %v1417 = vadd.f32 %v1400, 1.0
      %v1418 = vadd.f32 %v1402, 1.0
      %v1419 = vrcp.pop %v1403
      %v1420 = vrcp.pop %v1404
      %v1421 = vrcp.pop %v1405
      %v1422 = vrcp.pop %v1406
      %v1423 = vrcp.pop %v1407
      %v1424 = vrcp.pop %v1408
      %v1425 = vrcp.pop %v1409
      %v1426 = vrcp.pop %v1410
      %v1427 = vrcp.pop %v1411
      %v1428 = vrcp.pop %v1412
      %v1429 = vrcp.pop %v1413
      %v1430 = vrcp.pop %v1414
      %v1431 = vrcp.pop %v1415
      %v1432 = vrcp.pop %v1416
      %v1433 = vrcp.pop %v1417
      %v1434 = vrcp.pop %v1418
      %v1435 = vmul.f32 %v1293, %v1419
      %v1436 = vmul.f32 %v1296, %v1420
      %v1437 = vmul.f32 %v1301, %v1421
      %v1438 = vmul.f32 %v1304, %v1422
      %v1439 = vmul.f32 %v1309, %v1423
      %v1440 = vmul.f32 %v1312, %v1424
      %v1441 = vmul.f32 %v1317, %v1425
      %v1442 = vmul.f32 %v1320, %v1426
      %v1443 = vmul.f32 %v1325, %v1427
      %v1444 = vmul.f32 %v1328, %v1428
      %v1445 = vmul.f32 %v1333, %v1429
      %v1446 = vmul.f32 %v1336, %v1430
      %v1447 = vmul.f32 %v1341, %v1431
      %v1448 = vmul.f32 %v1344, %v1432
      %v1449 = vmul.f32 %v1349, %v1433
      %v1450 = vmul.f32 %v1352, %v1434
      %v1451 = vpack.c.bf16 %v1436, %v1435
      %v1452 = vpack.c.bf16 %v1438, %v1437
      %v1453 = vpack.c.bf16 %v1440, %v1439
      %v1454 = vpack.c.bf16 %v1442, %v1441
      %v1455 = vpack.c.bf16 %v1444, %v1443
      %v1456 = vpack.c.bf16 %v1446, %v1445
      %v1457 = vpack.c.bf16 %v1448, %v1447
      %v1458 = vpack.c.bf16 %v1450, %v1449
      %v1459 = vld [vmem:[%s9] sm:$0xf]
      %v1460 = vld [vmem:[%s9 + $0x4] sm:$0xf]
      %v1461 = vld [vmem:[%s9 + $0x8] sm:$0xf]
      %v1462 = vld [vmem:[%s9 + $0xc] sm:$0xf]
      %v1463 = vld [vmem:[%s9 + $0x10] sm:$0xf]
      %v1464 = vld [vmem:[%s9 + $0x14] sm:$0xf]
      %v1465 = vld [vmem:[%s9 + $0x18] sm:$0xf]
      %v1466 = vld [vmem:[%s9 + $0x1c] sm:$0xf]
      %v1467 = vld [vmem:[%s9 + $0x20] sm:$0xf]
      %v1468 = vld [vmem:[%s9 + $0x24] sm:$0xf]
      %v1469 = vld [vmem:[%s9 + $0x28] sm:$0xf]
      %v1470 = vld [vmem:[%s9 + $0x2c] sm:$0xf]
      %v1471 = vld [vmem:[%s9 + $0x30] sm:$0xf]
      %v1472 = vld [vmem:[%s9 + $0x34] sm:$0xf]
      %v1473 = vld [vmem:[%s9 + $0x38] sm:$0xf]
      %v1474 = vld [vmem:[%s9 + $0x3c] sm:$0xf]
      %v1475 = vld [vmem:[%s10] sm:$0x1]
      %v1477 = vlaneseq
      %v1478 = vshrl.u32 %v1477, 7
      %v1479 = vsub.s32 0, %v1478
      %v1480 = vrot.slane %v1475, %v1479
      %v1498 = vunpack.c.l.b16 %v1459
      %v1499 = vunpack.c.l.b16 %v1460
      %v1500 = vunpack.c.l.b16 %v1461
      %v1501 = vunpack.c.l.b16 %v1462
      %v1502 = vunpack.c.l.b16 %v1463
      %v1503 = vunpack.c.l.b16 %v1464
      %v1504 = vunpack.c.l.b16 %v1465
      %v1505 = vunpack.c.l.b16 %v1466
      %v1506 = vunpack.c.l.b16 %v1467
      %v1507 = vunpack.c.l.b16 %v1468
      %v1508 = vunpack.c.l.b16 %v1469
      %v1509 = vunpack.c.l.b16 %v1470
      %v1510 = vunpack.c.l.b16 %v1471
      %v1511 = vunpack.c.l.b16 %v1472
      %v1512 = vunpack.c.l.b16 %v1473
      %v1513 = vunpack.c.l.b16 %v1474
      %v1514 = vpack.c.b16 %v1499, %v1498
      %v1515 = vpack.c.b16 %v1501, %v1500
      %v1516 = vpack.c.b16 %v1503, %v1502
      %v1517 = vpack.c.b16 %v1505, %v1504
      %v1518 = vpack.c.b16 %v1507, %v1506
      %v1519 = vpack.c.b16 %v1509, %v1508
      %v1520 = vpack.c.b16 %v1511, %v1510
      %v1521 = vpack.c.b16 %v1513, %v1512
      %1530 = vmatprep.subr.bf16.mxu0 0
      %1531 = vmatpush1.bf16.msra.mxu0 %v1514
      %1532 = vmatprep.subr.bf16.mxu0 0
      %1533 = vmatpush1.bf16.msra.mxu0 %v1515
      %1534 = vmatprep.subr.bf16.mxu0 0
      %1535 = vmatpush1.bf16.msra.mxu0 %v1516
      %1536 = vmatprep.subr.bf16.mxu0 0
      %1537 = vmatpush1.bf16.msra.mxu0 %v1517
      %1538 = vmatprep.subr.bf16.mxu0 0
      %1539 = vmatpush1.bf16.msra.mxu0 %v1518
      %1540 = vmatprep.subr.bf16.mxu0 0
      %1541 = vmatpush1.bf16.msra.mxu0 %v1519
      %1542 = vmatprep.subr.bf16.mxu0 0
      %1543 = vmatpush1.bf16.msra.mxu0 %v1520
      %1544 = vmatprep.subr.bf16.mxu0 0
      %1545 = vmatpush1.bf16.msra.mxu0 %v1521
      %1546 = vmatprep.subr.bf16.mxu0 0
      %1547 = vmatpush1.bf16.msra.mxu0 0
      %1548 = vmatprep.subr.bf16.mxu0 0
      %1549 = vmatpush1.bf16.msra.mxu0 0
      %1550 = vmatprep.subr.bf16.mxu0 0
      %1551 = vmatpush1.bf16.msra.mxu0 0
      %1552 = vmatprep.subr.bf16.mxu0 0
      %1553 = vmatpush1.bf16.msra.mxu0 0
      %1554 = vmatprep.subr.bf16.mxu0 0
      %1555 = vmatpush1.bf16.msra.mxu0 0
      %1556 = vmatprep.subr.bf16.mxu0 0
      %1557 = vmatpush1.bf16.msra.mxu0 0
      %1558 = vmatprep.subr.bf16.mxu0 0
      %1559 = vmatpush1.bf16.msra.mxu0 0
      %1560 = vmatprep.subr.bf16.mxu0 0
      %1561 = vmatpush1.bf16.msra.mxu0 0
      %1562 = vmatprep.mubr.bf16.mxu0 0
      %1563 = vmatmul.mubr.bf16.gmra.mrb[0].mxu0 %v1451
      %v1564 = vpop.f32.mrb[0].mxu0
      %v1565 = vadd.f32 %v1480, %v1564
      %v1566 = vpop.f32.mrb[0].mxu0
      %v1567 = vpop.f32.mrb[0].mxu0
      %v1568 = vadd.f32 %v1480, %v1567
      %v1569 = vpop.f32.mrb[0].mxu0
      %1570 = vmatprep.mubr.bf16.mxu0 0
      %1571 = vmatmul.mubr.bf16.gmra.mrb[0].mxu0 %v1452
      %v1572 = vpop.f32.mrb[0].mxu0
      %v1573 = vadd.f32 %v1480, %v1572
      %v1574 = vpop.f32.mrb[0].mxu0
      %v1575 = vpop.f32.mrb[0].mxu0
      %v1576 = vadd.f32 %v1480, %v1575
      %v1577 = vpop.f32.mrb[0].mxu0
      %1578 = vmatprep.mubr.bf16.mxu0 0
      %1579 = vmatmul.mubr.bf16.gmra.mrb[0].mxu0 %v1453
      %v1580 = vpop.f32.mrb[0].mxu0
      %v1581 = vadd.f32 %v1480, %v1580
      %v1582 = vpop.f32.mrb[0].mxu0
      %v1583 = vpop.f32.mrb[0].mxu0
      %v1584 = vadd.f32 %v1480, %v1583
      %v1585 = vpop.f32.mrb[0].mxu0
      %1586 = vmatprep.mubr.bf16.mxu0 0
      %1587 = vmatmul.mubr.bf16.gmra.mrb[0].mxu0 %v1454
      %v1588 = vpop.f32.mrb[0].mxu0
      %v1589 = vadd.f32 %v1480, %v1588
      %v1590 = vpop.f32.mrb[0].mxu0
      %v1591 = vpop.f32.mrb[0].mxu0
      %v1592 = vadd.f32 %v1480, %v1591
      %v1593 = vpop.f32.mrb[0].mxu0
      %1594 = vmatprep.mubr.bf16.mxu0 0
      %1595 = vmatmul.mubr.bf16.gmra.mrb[0].mxu0 %v1455
      %v1596 = vpop.f32.mrb[0].mxu0
      %v1597 = vadd.f32 %v1480, %v1596
      %v1598 = vpop.f32.mrb[0].mxu0
      %v1599 = vpop.f32.mrb[0].mxu0
      %v1600 = vadd.f32 %v1480, %v1599
      %v1601 = vpop.f32.mrb[0].mxu0
      %1602 = vmatprep.mubr.bf16.mxu0 0
      %1603 = vmatmul.mubr.bf16.gmra.mrb[0].mxu0 %v1456
      %v1604 = vpop.f32.mrb[0].mxu0
      %v1605 = vadd.f32 %v1480, %v1604
      %v1606 = vpop.f32.mrb[0].mxu0
      %v1607 = vpop.f32.mrb[0].mxu0
      %v1608 = vadd.f32 %v1480, %v1607
      %v1609 = vpop.f32.mrb[0].mxu0
      %1610 = vmatprep.mubr.bf16.mxu0 0
      %1611 = vmatmul.mubr.bf16.gmra.mrb[0].mxu0 %v1457
      %v1612 = vpop.f32.mrb[0].mxu0
      %v1613 = vadd.f32 %v1480, %v1612
      %v1614 = vpop.f32.mrb[0].mxu0
      %v1615 = vpop.f32.mrb[0].mxu0
      %v1616 = vadd.f32 %v1480, %v1615
      %v1617 = vpop.f32.mrb[0].mxu0
      %1618 = vmatprep.mubr.bf16.mxu0 0
      %1619 = vmatmul.mubr.bf16.gmra.mrb[0].mxu0 %v1458
      %v1620 = vpop.f32.mrb[0].mxu0
      %v1621 = vadd.f32 %v1480, %v1620
      %v1622 = vpop.f32.mrb[0].mxu0
      %v1623 = vpop.f32.mrb[0].mxu0
      %v1624 = vadd.f32 %v1480, %v1623
      %v1625 = vpop.f32.mrb[0].mxu0
      %1626 = vdwg.mxu0
      %v1627 = vsub.f32 0.0, %v1565
      %v1628 = vsub.f32 0.0, %v1568
      %v1629 = vsub.f32 0.0, %v1573
      %v1630 = vsub.f32 0.0, %v1576
      %v1631 = vsub.f32 0.0, %v1581
      %v1632 = vsub.f32 0.0, %v1584
      %v1633 = vsub.f32 0.0, %v1589
      %v1634 = vsub.f32 0.0, %v1592
      %v1635 = vsub.f32 0.0, %v1597
      %v1636 = vsub.f32 0.0, %v1600
      %v1637 = vsub.f32 0.0, %v1605
      %v1638 = vsub.f32 0.0, %v1608
      %v1639 = vsub.f32 0.0, %v1613
      %v1640 = vsub.f32 0.0, %v1616
      %v1641 = vsub.f32 0.0, %v1621
      %v1642 = vsub.f32 0.0, %v1624
      %v1643 = vmul.f32 %v1627, 1.442695
      %v1644 = vpow.pop %v1643
      %v1645 = vmul.f32 %v1628, 1.442695
      %v1646 = vpow.pop %v1645
      %v1647 = vmul.f32 %v1629, 1.442695
      %v1648 = vpow.pop %v1647
      %v1649 = vmul.f32 %v1630, 1.442695
      %v1650 = vpow.pop %v1649
      %v1651 = vmul.f32 %v1631, 1.442695
      %v1652 = vpow.pop %v1651
      %v1653 = vmul.f32 %v1632, 1.442695
      %v1654 = vpow.pop %v1653
      %v1655 = vmul.f32 %v1633, 1.442695
      %v1656 = vpow.pop %v1655
      %v1657 = vmul.f32 %v1634, 1.442695
      %v1658 = vpow.pop %v1657
      %v1659 = vmul.f32 %v1635, 1.442695
      %v1660 = vpow.pop %v1659
      %v1661 = vmul.f32 %v1636, 1.442695
      %v1662 = vpow.pop %v1661
      %v1663 = vmul.f32 %v1637, 1.442695
      %v1664 = vpow.pop %v1663
      %v1665 = vmul.f32 %v1638, 1.442695
      %v1666 = vpow.pop %v1665
      %v1667 = vmul.f32 %v1639, 1.442695
      %v1668 = vpow.pop %v1667
      %v1669 = vmul.f32 %v1640, 1.442695
      %v1670 = vpow.pop %v1669
      %v1671 = vmul.f32 %v1641, 1.442695
      %v1672 = vpow.pop %v1671
      %v1673 = vmul.f32 %v1642, 1.442695
      %v1674 = vpow.pop %v1673
      %v1675 = vadd.f32 %v1644, 1.0
      %v1676 = vadd.f32 %v1646, 1.0
      %v1677 = vadd.f32 %v1648, 1.0
      %v1678 = vadd.f32 %v1650, 1.0
      %v1679 = vadd.f32 %v1652, 1.0
      %v1680 = vadd.f32 %v1654, 1.0
      %v1681 = vadd.f32 %v1656, 1.0
      %v1682 = vadd.f32 %v1658, 1.0
      %v1683 = vadd.f32 %v1660, 1.0
      %v1684 = vadd.f32 %v1662, 1.0
      %v1685 = vadd.f32 %v1664, 1.0
      %v1686 = vadd.f32 %v1666, 1.0
      %v1687 = vadd.f32 %v1668, 1.0
      %v1688 = vadd.f32 %v1670, 1.0
      %v1689 = vadd.f32 %v1672, 1.0
      %v1690 = vadd.f32 %v1674, 1.0
      %v1691 = vrcp.pop %v1675
      %v1692 = vrcp.pop %v1676
      %v1693 = vrcp.pop %v1677
      %v1694 = vrcp.pop %v1678
      %v1695 = vrcp.pop %v1679
      %v1696 = vrcp.pop %v1680
      %v1697 = vrcp.pop %v1681
      %v1698 = vrcp.pop %v1682
      %v1699 = vrcp.pop %v1683
      %v1700 = vrcp.pop %v1684
      %v1701 = vrcp.pop %v1685
      %v1702 = vrcp.pop %v1686
      %v1703 = vrcp.pop %v1687
      %v1704 = vrcp.pop %v1688
      %v1705 = vrcp.pop %v1689
      %v1706 = vrcp.pop %v1690
      %v1707 = vmul.f32 %v1565, %v1691
      %v1708 = vmul.f32 %v1568, %v1692
      %v1709 = vmul.f32 %v1573, %v1693
      %v1710 = vmul.f32 %v1576, %v1694
      %v1711 = vmul.f32 %v1581, %v1695
      %v1712 = vmul.f32 %v1584, %v1696
      %v1713 = vmul.f32 %v1589, %v1697
      %v1714 = vmul.f32 %v1592, %v1698
      %v1715 = vmul.f32 %v1597, %v1699
      %v1716 = vmul.f32 %v1600, %v1700
      %v1717 = vmul.f32 %v1605, %v1701
      %v1718 = vmul.f32 %v1608, %v1702
      %v1719 = vmul.f32 %v1613, %v1703
      %v1720 = vmul.f32 %v1616, %v1704
      %v1721 = vmul.f32 %v1621, %v1705
      %v1722 = vmul.f32 %v1624, %v1706
      %v1723 = vpack.c.bf16 %v1708, %v1707
      %v1724 = vpack.c.bf16 %v1710, %v1709
      %v1725 = vpack.c.bf16 %v1712, %v1711
      %v1726 = vpack.c.bf16 %v1714, %v1713
      %v1727 = vpack.c.bf16 %v1716, %v1715
      %v1728 = vpack.c.bf16 %v1718, %v1717
      %v1729 = vpack.c.bf16 %v1720, %v1719
      %v1730 = vpack.c.bf16 %v1722, %v1721
      %v1731 = vld [vmem:[%s11] sm:$0xf]
      %v1732 = vld [vmem:[%s11 + $0x4] sm:$0xf]
      %v1733 = vld [vmem:[%s11 + $0x8] sm:$0xf]
      %v1734 = vld [vmem:[%s11 + $0xc] sm:$0xf]
      %v1735 = vld [vmem:[%s11 + $0x10] sm:$0xf]
      %v1736 = vld [vmem:[%s11 + $0x14] sm:$0xf]
      %v1737 = vld [vmem:[%s11 + $0x18] sm:$0xf]
      %v1738 = vld [vmem:[%s11 + $0x1c] sm:$0xf]
      %v1739 = vld [vmem:[%s11 + $0x20] sm:$0xf]
      %v1740 = vld [vmem:[%s11 + $0x24] sm:$0xf]
      %v1741 = vld [vmem:[%s11 + $0x28] sm:$0xf]
      %v1742 = vld [vmem:[%s11 + $0x2c] sm:$0xf]
      %v1743 = vld [vmem:[%s11 + $0x30] sm:$0xf]
      %v1744 = vld [vmem:[%s11 + $0x34] sm:$0xf]
      %v1745 = vld [vmem:[%s11 + $0x38] sm:$0xf]
      %v1746 = vld [vmem:[%s11 + $0x3c] sm:$0xf]
      %v1747 = vld [vmem:[%s12] sm:$0x1]
      %v1749 = vlaneseq
      %v1750 = vshrl.u32 %v1749, 7
      %v1751 = vsub.s32 0, %v1750
      %v1752 = vrot.slane %v1747, %v1751
      %v1770 = vunpack.c.l.b16 %v1731
      %v1771 = vunpack.c.l.b16 %v1732
      %v1772 = vunpack.c.l.b16 %v1733
      %v1773 = vunpack.c.l.b16 %v1734
      %v1774 = vunpack.c.l.b16 %v1735
      %v1775 = vunpack.c.l.b16 %v1736
      %v1776 = vunpack.c.l.b16 %v1737
      %v1777 = vunpack.c.l.b16 %v1738
      %v1778 = vunpack.c.l.b16 %v1739
      %v1779 = vunpack.c.l.b16 %v1740
      %v1780 = vunpack.c.l.b16 %v1741
      %v1781 = vunpack.c.l.b16 %v1742
      %v1782 = vunpack.c.l.b16 %v1743
      %v1783 = vunpack.c.l.b16 %v1744
      %v1784 = vunpack.c.l.b16 %v1745
      %v1785 = vunpack.c.l.b16 %v1746
      %v1786 = vpack.c.b16 %v1771, %v1770
      %v1787 = vpack.c.b16 %v1773, %v1772
      %v1788 = vpack.c.b16 %v1775, %v1774
      %v1789 = vpack.c.b16 %v1777, %v1776
      %v1790 = vpack.c.b16 %v1779, %v1778
      %v1791 = vpack.c.b16 %v1781, %v1780
      %v1792 = vpack.c.b16 %v1783, %v1782
      %v1793 = vpack.c.b16 %v1785, %v1784
      %1802 = vmatprep.subr.bf16.mxu0 0
      %1803 = vmatpush1.bf16.msra.mxu0 %v1786
      %1804 = vmatprep.subr.bf16.mxu0 0
      %1805 = vmatpush1.bf16.msra.mxu0 %v1787
      %1806 = vmatprep.subr.bf16.mxu0 0
      %1807 = vmatpush1.bf16.msra.mxu0 %v1788
      %1808 = vmatprep.subr.bf16.mxu0 0
      %1809 = vmatpush1.bf16.msra.mxu0 %v1789
      %1810 = vmatprep.subr.bf16.mxu0 0
      %1811 = vmatpush1.bf16.msra.mxu0 %v1790
      %1812 = vmatprep.subr.bf16.mxu0 0
      %1813 = vmatpush1.bf16.msra.mxu0 %v1791
      %1814 = vmatprep.subr.bf16.mxu0 0
      %1815 = vmatpush1.bf16.msra.mxu0 %v1792
      %1816 = vmatprep.subr.bf16.mxu0 0
      %1817 = vmatpush1.bf16.msra.mxu0 %v1793
      %1818 = vmatprep.subr.bf16.mxu0 0
      %1819 = vmatpush1.bf16.msra.mxu0 0
      %1820 = vmatprep.subr.bf16.mxu0 0
      %1821 = vmatpush1.bf16.msra.mxu0 0
      %1822 = vmatprep.subr.bf16.mxu0 0
      %1823 = vmatpush1.bf16.msra.mxu0 0
      %1824 = vmatprep.subr.bf16.mxu0 0
      %1825 = vmatpush1.bf16.msra.mxu0 0
      %1826 = vmatprep.subr.bf16.mxu0 0
      %1827 = vmatpush1.bf16.msra.mxu0 0
      %1828 = vmatprep.subr.bf16.mxu0 0
      %1829 = vmatpush1.bf16.msra.mxu0 0
      %1830 = vmatprep.subr.bf16.mxu0 0
      %1831 = vmatpush1.bf16.msra.mxu0 0
      %1832 = vmatprep.subr.bf16.mxu0 0
      %1833 = vmatpush1.bf16.msra.mxu0 0
      %1834 = vmatprep.mubr.bf16.mxu0 0
      %1835 = vmatmul.mubr.bf16.gmra.mrb[0].mxu0 %v1723
      %v1836 = vpop.f32.mrb[0].mxu0
      %v1837 = vadd.f32 %v1752, %v1836
      %v1838 = vpop.f32.mrb[0].mxu0
      %v1839 = vpop.f32.mrb[0].mxu0
      %v1840 = vadd.f32 %v1752, %v1839
      %v1841 = vpop.f32.mrb[0].mxu0
      %1842 = vmatprep.mubr.bf16.mxu0 0
      %1843 = vmatmul.mubr.bf16.gmra.mrb[0].mxu0 %v1724
      %v1844 = vpop.f32.mrb[0].mxu0
      %v1845 = vadd.f32 %v1752, %v1844
      %v1846 = vpop.f32.mrb[0].mxu0
      %v1847 = vpop.f32.mrb[0].mxu0
      %v1848 = vadd.f32 %v1752, %v1847
      %v1849 = vpop.f32.mrb[0].mxu0
      %1850 = vmatprep.mubr.bf16.mxu0 0
      %1851 = vmatmul.mubr.bf16.gmra.mrb[0].mxu0 %v1725
      %v1852 = vpop.f32.mrb[0].mxu0
      %v1853 = vadd.f32 %v1752, %v1852
      %v1854 = vpop.f32.mrb[0].mxu0
      %v1855 = vpop.f32.mrb[0].mxu0
      %v1856 = vadd.f32 %v1752, %v1855
      %v1857 = vpop.f32.mrb[0].mxu0
      %1858 = vmatprep.mubr.bf16.mxu0 0
      %1859 = vmatmul.mubr.bf16.gmra.mrb[0].mxu0 %v1726
      %v1860 = vpop.f32.mrb[0].mxu0
      %v1861 = vadd.f32 %v1752, %v1860
      %v1862 = vpop.f32.mrb[0].mxu0
      %v1863 = vpop.f32.mrb[0].mxu0
      %v1864 = vadd.f32 %v1752, %v1863
      %v1865 = vpop.f32.mrb[0].mxu0
      %1866 = vmatprep.mubr.bf16.mxu0 0
      %1867 = vmatmul.mubr.bf16.gmra.mrb[0].mxu0 %v1727
      %v1868 = vpop.f32.mrb[0].mxu0
      %v1869 = vadd.f32 %v1752, %v1868
      %v1870 = vpop.f32.mrb[0].mxu0
      %v1871 = vpop.f32.mrb[0].mxu0
      %v1872 = vadd.f32 %v1752, %v1871
      %v1873 = vpop.f32.mrb[0].mxu0
      %1874 = vmatprep.mubr.bf16.mxu0 0
      %1875 = vmatmul.mubr.bf16.gmra.mrb[0].mxu0 %v1728
      %v1876 = vpop.f32.mrb[0].mxu0
      %v1877 = vadd.f32 %v1752, %v1876
      %v1878 = vpop.f32.mrb[0].mxu0
      %v1879 = vpop.f32.mrb[0].mxu0
      %v1880 = vadd.f32 %v1752, %v1879
      %v1881 = vpop.f32.mrb[0].mxu0
      %1882 = vmatprep.mubr.bf16.mxu0 0
      %1883 = vmatmul.mubr.bf16.gmra.mrb[0].mxu0 %v1729
      %v1884 = vpop.f32.mrb[0].mxu0
      %v1885 = vadd.f32 %v1752, %v1884
      %v1886 = vpop.f32.mrb[0].mxu0
      %v1887 = vpop.f32.mrb[0].mxu0
      %v1888 = vadd.f32 %v1752, %v1887
      %v1889 = vpop.f32.mrb[0].mxu0
      %1890 = vmatprep.mubr.bf16.mxu0 0
      %1891 = vmatmul.mubr.bf16.gmra.mrb[0].mxu0 %v1730
      %v1892 = vpop.f32.mrb[0].mxu0
      %v1893 = vadd.f32 %v1752, %v1892
      %v1894 = vpop.f32.mrb[0].mxu0
      %v1895 = vpop.f32.mrb[0].mxu0
      %v1896 = vadd.f32 %v1752, %v1895
      %v1897 = vpop.f32.mrb[0].mxu0
      %1898 = vdwg.mxu0
      %1899 = vst [vmem:[%s464] sm:$0xff] %v1837
      %1900 = vst [vmem:[%s464 + $0x8] sm:$0xff] %v1840
      %1901 = vst [vmem:[%s464 + $0x10] sm:$0xff] %v1845
      %1902 = vst [vmem:[%s464 + $0x18] sm:$0xff] %v1848
      %1903 = vst [vmem:[%s464 + $0x20] sm:$0xff] %v1853
      %1904 = vst [vmem:[%s464 + $0x28] sm:$0xff] %v1856
      %1905 = vst [vmem:[%s464 + $0x30] sm:$0xff] %v1861
      %1906 = vst [vmem:[%s464 + $0x38] sm:$0xff] %v1864
      %1907 = vst [vmem:[%s464 + $0x40] sm:$0xff] %v1869
      %1908 = vst [vmem:[%s464 + $0x48] sm:$0xff] %v1872
      %1909 = vst [vmem:[%s464 + $0x50] sm:$0xff] %v1877
      %1910 = vst [vmem:[%s464 + $0x58] sm:$0xff] %v1880
      %1911 = vst [vmem:[%s464 + $0x60] sm:$0xff] %v1885
      %1912 = vst [vmem:[%s464 + $0x68] sm:$0xff] %v1888
      %1913 = vst [vmem:[%s464 + $0x70] sm:$0xff] %v1893
      %1914 = vst [vmem:[%s464 + $0x78] sm:$0xff] %v1896
      %s1915 = smul.u32 16, %s24
      %p1916 = scmp.lt.s32.totalorder %s1915, 31
      %s1917 = scalar_select %p1916, %s1915, 31
      %s1918 = smul.addr %s1917, 8
      %s1919 = scalar_lea.vmem %s13, %s1918
      // Predicated region
      $region73: #{mlp_forward.1} parent=71 // pred_check
        %p1920 = pneg %p325
      $region74: #{mlp_forward.1} parent=71 // pred_check_branch
        %1922 = sbr.rel (%p1920) target = $region76
      $region75: #{mlp_forward.1} parent=71 // pred_region
        %s1923 = smul.u32 16, %s24
      $region76: #{mlp_forward.1} parent=71 // pred_fallthru
        _
    $region72: #{mlp_forward.1} parent=5 // pred_fallthru
      _
    %p1924 = scmp.le.s32.totalorder 2, %s19
    // Predicated region
    $region77: #{mlp_forward.1} parent=5 // pred_check
      %p1925 = pneg %p1924
    $region78: #{mlp_forward.1} parent=5 // pred_check_branch
      %1927 = sbr.rel (%p1925) target = $region80
    $region79: #{mlp_forward.1} parent=5 // pred_region
      %s1928 = ssub.s32 %s19, 2
      // Predicated region
      $region81: #{mlp_forward.1} parent=79 // pred_check
        %p1929 = pneg %p331
      $region82: #{mlp_forward.1} parent=79 // pred_check_branch
        %1931 = sbr.rel (%p1929) target = $region84
      $region83: #{mlp_forward.1} parent=79 // pred_region
        %s1932 = smul.u32 16, %s25
        %p1933 = scmp.lt.s32.totalorder %s1932, 31
        %s1934 = scalar_select %p1933, %s1932, 31
        %s1935 = smul.addr %s1934, 8
        %s1936 = scalar_lea.vmem %s13, %s1935
      $region84: #{mlp_forward.1} parent=79 // pred_fallthru
        _
    $region80: #{mlp_forward.1} parent=5 // pred_fallthru
      _
  $region6: #{mlp_forward.1} parent=0 // loop_footer
    %s23 = sadd.s32 1, %s19
  $region7: #{mlp_forward.1} parent=0 // loop_footer_branch
    %18 = sbr.rel target = $region3
  $region8: #{mlp_forward.1} parent=0 // loop_exit
    _

</llo_original>
